<compile_context>
chip_gen: v7x
topology: tpu7x:2x2x1
jax: 0.10.0
libtpu: 0.0.40
codegen_flags: <defaults>
</compile_context>

<pallas_src>
import jax
import jax.numpy as jnp
from jax import lax
from jax.experimental import pallas as pl
from jax.experimental.pallas import tpu as pltpu

BN_EPS = 1e-5
LEAKY_SLOPE = 0.2


def _leaky_relu(x, slope=LEAKY_SLOPE):
    return jnp.where(x > 0, x, slope * x)


def decoder_kernel(z_ref, w1_ref, b1_ref, w2_ref, b2_ref, gamma_ref, beta_ref,
                   w3_ref, b3_ref, out_ref):
    # --- Layer 1: Linear(latent_dim, 512) + LeakyReLU(0.2) ---------------
    # bf16 MXU operands, f32 accumulation.
    h1 = jnp.dot(z_ref[...].astype(jnp.bfloat16), w1_ref[...],
                 preferred_element_type=jnp.float32) + b1_ref[...]
    h1 = _leaky_relu(h1)

    # --- Layer 2: Linear(512, 512) ---------------------------------------
    h2 = jnp.dot(h1.astype(jnp.bfloat16), w2_ref[...],
                 preferred_element_type=jnp.float32) + b2_ref[...]

    # --- BatchNorm1d(512): training-mode batch stats, biased var ---------
    mean = jnp.mean(h2, axis=0, keepdims=True)
    var = jnp.mean(jnp.square(h2 - mean), axis=0, keepdims=True)
    inv_std = lax.rsqrt(var + BN_EPS)                      # EUP, cheap
    h2 = (h2 - mean) * inv_std * gamma_ref[...] + beta_ref[...]
    h2 = _leaky_relu(h2)

    # --- Layer 3: Linear(512, img_dim) + Tanh -----------------------------
    h3 = jnp.dot(h2.astype(jnp.bfloat16), w3_ref[...],
                 preferred_element_type=jnp.float32) + b3_ref[...]
    out_ref[...] = jnp.tanh(h3)                            # EUP


def decoder_forward(z, params, img_shape):
    """z: (B, latent_dim) f32. params: bf16 weights (in,out) + f32 biases/BN.
    Returns (B, C, H, W) f32."""
    B = z.shape[0]
    C, H, W = img_shape
    img_dim = C * H * W

    vmem = pl.BlockSpec(memory_space=pltpu.MemorySpace.VMEM)
    flat = pl.pallas_call(
        decoder_kernel,
        out_shape=jax.ShapeDtypeStruct((B, img_dim), jnp.float32),
        in_specs=[vmem] * 9,
        out_specs=vmem,
    )(z,
      params["w1"], params["b1"],
      params["w2"], params["b2"],
      params["gamma"], params["beta"],
      params["w3"], params["b3"])
    return flat.reshape(B, C, H, W)


def init_params(key, latent_dim, img_dim):
    """PyTorch Linear default init: U(-1/sqrt(fan_in), 1/sqrt(fan_in)) for
    weight and bias. Weights stored transposed (in, out) and cast to bf16 so
    the HBM arrays themselves are half-size. BatchNorm: gamma=1, beta=0."""
    dims = [(latent_dim, 512), (512, 512), (512, img_dim)]
    params = {}
    for i, (fan_in, fan_out) in enumerate(dims, start=1):
        key, kw, kb = jax.random.split(key, 3)
        bound = 1.0 / (fan_in ** 0.5)
        w = jax.random.uniform(kw, (fan_in, fan_out), jnp.float32, -bound, bound)
        params[f"w{i}"] = w.astype(jnp.bfloat16)
        params[f"b{i}"] = jax.random.uniform(
            kb, (1, fan_out), jnp.float32, -bound, bound)
    params["gamma"] = jnp.ones((1, 512), jnp.float32)
    params["beta"] = jnp.zeros((1, 512), jnp.float32)
    return params


def reference_forward(z, p, img_shape):
    """Pure-JAX reference with the same bf16-operand / f32-accumulate matmuls."""
    h = jnp.dot(z.astype(jnp.bfloat16), p["w1"],
                preferred_element_type=jnp.float32) + p["b1"]
    h = jnp.where(h > 0, h, LEAKY_SLOPE * h)
    h = jnp.dot(h.astype(jnp.bfloat16), p["w2"],
                preferred_element_type=jnp.float32) + p["b2"]
    mean = jnp.mean(h, axis=0, keepdims=True)
    var = jnp.mean(jnp.square(h - mean), axis=0, keepdims=True)
    h = (h - mean) * lax.rsqrt(var + BN_EPS) * p["gamma"] + p["beta"]
    h = jnp.where(h > 0, h, LEAKY_SLOPE * h)
    h = jnp.dot(h.astype(jnp.bfloat16), p["w3"],
                preferred_element_type=jnp.float32) + p["b3"]
    h = jnp.tanh(h)
    return h.reshape(z.shape[0], *img_shape)


if __name__ == "__main__":
    # Small shapes consistent with the module: latent_dim=32, 1x16x16 image.
    latent_dim = 32
    channels, img_size = 1, 16
    img_shape = (channels, img_size, img_size)     # prod = 256 (lane-dense)
    batch = 8

    key = jax.random.PRNGKey(0)
    key, kz = jax.random.split(key)
    z = jax.random.normal(kz, (batch, latent_dim), jnp.float32)
    params = init_params(key, latent_dim, channels * img_size * img_size)

    out = decoder_forward(z, params, img_shape)
    out = jax.block_until_ready(out)

    ref = reference_forward(z, params, img_shape)
    assert out.shape == (batch, channels, img_size, img_size)
    assert jnp.allclose(out, ref, atol=1e-3, rtol=1e-3), "mismatch vs reference"

    print("KERNEL_OK")
</pallas_src>

<mosaic_0001>
module attributes {stable_mosaic.version = 11 : i64} {
  func.func @decoder_kernel(%arg0: memref<8x32xf32, #tpu.memory_space<vmem>>, %arg1: memref<32x512xbf16, #tpu.memory_space<vmem>>, %arg2: memref<1x512xf32, #tpu.memory_space<vmem>>, %arg3: memref<512x512xbf16, #tpu.memory_space<vmem>>, %arg4: memref<1x512xf32, #tpu.memory_space<vmem>>, %arg5: memref<1x512xf32, #tpu.memory_space<vmem>>, %arg6: memref<1x512xf32, #tpu.memory_space<vmem>>, %arg7: memref<512x256xbf16, #tpu.memory_space<vmem>>, %arg8: memref<1x256xf32, #tpu.memory_space<vmem>>, %arg9: memref<8x256xf32, #tpu.memory_space<vmem>>) attributes {dimension_semantics = [], scalar_prefetch = 0 : i64, scratch_operands = 0 : i64, tpu.core_type = #tpu.core_type<tc>} {
    %c0 = arith.constant 0 : index
    %c0_0 = arith.constant 0 : index
    %0 = vector.load %arg0[%c0, %c0_0] : memref<8x32xf32, #tpu.memory_space<vmem>>, vector<8x32xf32>
    %1 = arith.truncf %0 : vector<8x32xf32> to vector<8x32xbf16>
    %c0_1 = arith.constant 0 : index
    %c0_2 = arith.constant 0 : index
    %2 = vector.load %arg1[%c0_1, %c0_2] : memref<32x512xbf16, #tpu.memory_space<vmem>>, vector<32x512xbf16>
    %cst = arith.constant dense<0.000000e+00> : vector<8x512xf32>
    %3 = tpu.matmul %1, %2, %cst {dimension_numbers = #tpu.dot_dimension_numbers<[1], [0], [0], [1], [0, 0, 1, 1], [], []>} : vector<8x32xbf16>, vector<32x512xbf16>, vector<8x512xf32> -> vector<8x512xf32>
    %c0_3 = arith.constant 0 : index
    %c0_4 = arith.constant 0 : index
    %4 = vector.load %arg2[%c0_3, %c0_4] : memref<1x512xf32, #tpu.memory_space<vmem>>, vector<1x512xf32>
    %5 = vector.broadcast %4 : vector<1x512xf32> to vector<8x512xf32>
    %6 = arith.addf %3, %5 : vector<8x512xf32>
    %cst_5 = arith.constant 0.000000e+00 : f32
    %7 = vector.broadcast %cst_5 : f32 to vector<8x512xf32>
    %8 = arith.cmpf ogt, %6, %7 : vector<8x512xf32>
    %cst_6 = arith.constant 2.000000e-01 : f32
    %9 = vector.broadcast %cst_6 : f32 to vector<8x512xf32>
    %10 = arith.mulf %9, %6 : vector<8x512xf32>
    %11 = arith.select %8, %6, %10 : vector<8x512xi1>, vector<8x512xf32>
    %12 = arith.truncf %11 : vector<8x512xf32> to vector<8x512xbf16>
    %c0_7 = arith.constant 0 : index
    %c0_8 = arith.constant 0 : index
    %13 = vector.load %arg3[%c0_7, %c0_8] : memref<512x512xbf16, #tpu.memory_space<vmem>>, vector<512x512xbf16>
    %cst_9 = arith.constant dense<0.000000e+00> : vector<8x512xf32>
    %14 = tpu.matmul %12, %13, %cst_9 {dimension_numbers = #tpu.dot_dimension_numbers<[1], [0], [0], [1], [0, 0, 1, 1], [], []>} : vector<8x512xbf16>, vector<512x512xbf16>, vector<8x512xf32> -> vector<8x512xf32>
    %c0_10 = arith.constant 0 : index
    %c0_11 = arith.constant 0 : index
    %15 = vector.load %arg4[%c0_10, %c0_11] : memref<1x512xf32, #tpu.memory_space<vmem>>, vector<1x512xf32>
    %16 = vector.broadcast %15 : vector<1x512xf32> to vector<8x512xf32>
    %17 = arith.addf %14, %16 : vector<8x512xf32>
    %cst_12 = arith.constant dense<0.000000e+00> : vector<512xf32>
    %18 = vector.multi_reduction <add>, %17, %cst_12 [0] : vector<8x512xf32> to vector<512xf32>
    %19 = vector.shape_cast %18 : vector<512xf32> to vector<1x512xf32>
    %cst_13 = arith.constant 8.000000e+00 : f32
    %20 = vector.broadcast %cst_13 : f32 to vector<1x512xf32>
    %21 = arith.divf %19, %20 : vector<1x512xf32>
    %22 = vector.broadcast %21 : vector<1x512xf32> to vector<8x512xf32>
    %23 = arith.subf %17, %22 : vector<8x512xf32>
    %24 = arith.mulf %23, %23 : vector<8x512xf32>
    %cst_14 = arith.constant dense<0.000000e+00> : vector<512xf32>
    %25 = vector.multi_reduction <add>, %24, %cst_14 [0] : vector<8x512xf32> to vector<512xf32>
    %26 = vector.shape_cast %25 : vector<512xf32> to vector<1x512xf32>
    %cst_15 = arith.constant 8.000000e+00 : f32
    %27 = vector.broadcast %cst_15 : f32 to vector<1x512xf32>
    %28 = arith.divf %26, %27 : vector<1x512xf32>
    %cst_16 = arith.constant 9.99999974E-6 : f32
    %29 = vector.broadcast %cst_16 : f32 to vector<1x512xf32>
    %30 = arith.addf %28, %29 : vector<1x512xf32>
    %31 = math.rsqrt %30 : vector<1x512xf32>
    %32 = vector.broadcast %21 : vector<1x512xf32> to vector<8x512xf32>
    %33 = arith.subf %17, %32 : vector<8x512xf32>
    %34 = vector.broadcast %31 : vector<1x512xf32> to vector<8x512xf32>
    %35 = arith.mulf %33, %34 : vector<8x512xf32>
    %c0_17 = arith.constant 0 : index
    %c0_18 = arith.constant 0 : index
    %36 = vector.load %arg5[%c0_17, %c0_18] : memref<1x512xf32, #tpu.memory_space<vmem>>, vector<1x512xf32>
    %37 = vector.broadcast %36 : vector<1x512xf32> to vector<8x512xf32>
    %38 = arith.mulf %35, %37 : vector<8x512xf32>
    %c0_19 = arith.constant 0 : index
    %c0_20 = arith.constant 0 : index
    %39 = vector.load %arg6[%c0_19, %c0_20] : memref<1x512xf32, #tpu.memory_space<vmem>>, vector<1x512xf32>
    %40 = vector.broadcast %39 : vector<1x512xf32> to vector<8x512xf32>
    %41 = arith.addf %38, %40 : vector<8x512xf32>
    %cst_21 = arith.constant 0.000000e+00 : f32
    %42 = vector.broadcast %cst_21 : f32 to vector<8x512xf32>
    %43 = arith.cmpf ogt, %41, %42 : vector<8x512xf32>
    %cst_22 = arith.constant 2.000000e-01 : f32
    %44 = vector.broadcast %cst_22 : f32 to vector<8x512xf32>
    %45 = arith.mulf %44, %41 : vector<8x512xf32>
    %46 = arith.select %43, %41, %45 : vector<8x512xi1>, vector<8x512xf32>
    %47 = arith.truncf %46 : vector<8x512xf32> to vector<8x512xbf16>
    %c0_23 = arith.constant 0 : index
    %c0_24 = arith.constant 0 : index
    %48 = vector.load %arg7[%c0_23, %c0_24] : memref<512x256xbf16, #tpu.memory_space<vmem>>, vector<512x256xbf16>
    %cst_25 = arith.constant dense<0.000000e+00> : vector<8x256xf32>
    %49 = tpu.matmul %47, %48, %cst_25 {dimension_numbers = #tpu.dot_dimension_numbers<[1], [0], [0], [1], [0, 0, 1, 1], [], []>} : vector<8x512xbf16>, vector<512x256xbf16>, vector<8x256xf32> -> vector<8x256xf32>
    %c0_26 = arith.constant 0 : index
    %c0_27 = arith.constant 0 : index
    %50 = vector.load %arg8[%c0_26, %c0_27] : memref<1x256xf32, #tpu.memory_space<vmem>>, vector<1x256xf32>
    %51 = vector.broadcast %50 : vector<1x256xf32> to vector<8x256xf32>
    %52 = arith.addf %49, %51 : vector<8x256xf32>
    %53 = math.tanh %52 : vector<8x256xf32>
    %c0_28 = arith.constant 0 : index
    %c0_29 = arith.constant 0 : index
    %54 = vector.load %arg9[%c0_28, %c0_29] : memref<8x256xf32, #tpu.memory_space<vmem>>, vector<8x256xf32>
    tpu.vector_store %arg9[%c0_28, %c0_29], %53 {strides = array<i32>} : memref<8x256xf32, #tpu.memory_space<vmem>>, vector<8x256xf32>,
    return
  }
}

</mosaic_0001>

<llo_original>
// kernel: tpu_custom_call.1
$region0: #{tpu_custom_call.1}
  #allocation0 [shape = 'u32[]', space=smem, size = 0x4, offset = 0x4, fixed_abs, tag = 'smem constant byte address 0x4 - core index']
  #allocation1 [shape = 'u32[144,128]{1,0:T(1,128)}', space=vmem, size = 0x12000, scoped, tag = 'internal scratch']
  %s0 = inlined_call_operand.hbm [shape: f32[8,32], index: 0, kind: input, shape index: {}]
  %s1 = inlined_call_operand.hbm [shape: bf16[32,512], index: 1, kind: input, shape index: {}]
  %s2 = inlined_call_operand.vmem [shape: f32[1,512], index: 2, kind: input, shape index: {}]
  %s3 = inlined_call_operand.hbm [shape: bf16[512,512], index: 3, kind: input, shape index: {}]
  %s4 = inlined_call_operand.vmem [shape: f32[1,512], index: 4, kind: input, shape index: {}]
  %s5 = inlined_call_operand.vmem [shape: f32[1,512], index: 5, kind: input, shape index: {}]
  %s6 = inlined_call_operand.vmem [shape: f32[1,512], index: 6, kind: input, shape index: {}]
  %s7 = inlined_call_operand.hbm [shape: bf16[512,256], index: 7, kind: input, shape index: {}]
  %s8 = inlined_call_operand.vmem [shape: f32[1,256], index: 8, kind: input, shape index: {}]
  %s9 = inlined_call_operand.hbm [shape: f32[8,256], index: 9, kind: output, shape index: {}]
  %s10 = sld [smem:[#allocation0]]
  $region62: #{tpu_custom_call.1} parent=0
    _
  %s12 = ssub.s32 1, %s10
  %s13 = scalar_select 0, %s12, %s10
  $region1: #{tpu_custom_call.1} parent=0
    #allocation2 [shape = 'u8[4096]{0}', space=vmem, size = 0x1000, scoped, tag = 'input window, operand 0, single buffered']
    #allocation3 [shape = 's32[1]{0}', space=sflag, size = 0x4, scoped, tag = 'scoped memory for tpu_custom_call.1']
    #allocation4 [shape = 's32[1]{0}', space=sflag, size = 0x4, scoped, tag = 'scoped memory for tpu_custom_call.1']
    #allocation5 [shape = 'u8[32768]{0}', space=vmem, size = 0x8000, scoped, tag = 'input window, operand 1, single buffered']
    #allocation6 [shape = 's32[1]{0}', space=sflag, size = 0x4, scoped, tag = 'scoped memory for tpu_custom_call.1']
    #allocation7 [shape = 'u8[524288]{0}', space=vmem, size = 0x80000, scoped, tag = 'input window, operand 3, single buffered']
    #allocation8 [shape = 'u8[262144]{0}', space=vmem, size = 0x40000, scoped, tag = 'input window, operand 7, single buffered']
    #allocation9 [shape = 's32[1]{0}', space=sflag, size = 0x4, scoped, tag = 'scoped memory for tpu_custom_call.1']
    #allocation10 [shape = 'u8[8192]{0}', space=vmem, size = 0x2000, scoped, tag = 'output window, operand 0, single buffered']
    %14 = vsyncpa [#allocation3], 0
    %15 = vsyncpa [#allocation6], 0
    %16 = vsyncpa [#allocation9], 0
    %17 = vsyncpa [#allocation4], 0
    // Predicated region
    $region2: #{tpu_custom_call.1} parent=1 // pred_check
      _
    $region3: #{tpu_custom_call.1} parent=1 // pred_check_branch
      %19 = sbr.rel (0) target = $region5
    $region4: #{tpu_custom_call.1} parent=1 // pred_region
      %s21 = ssub.s32 128, 128
      %22 = vsyncadd [#allocation3], %s21
      %s24 = sshll.u32 [#allocation2], 4
      %s25 = int_to_ptr.vmem [resolvable:$true] %s24
      %27 = dma.hbm_to_vmem [thread:$0]  %s0, 128, %s25, [#allocation3]
    $region5: #{tpu_custom_call.1} parent=1 // pred_fallthru
      _
    // Predicated region
    $region6: #{tpu_custom_call.1} parent=1 // pred_check
      _
    $region7: #{tpu_custom_call.1} parent=1 // pred_check_branch
      %29 = sbr.rel (0) target = $region9
    $region8: #{tpu_custom_call.1} parent=1 // pred_region
      %s31 = ssub.s32 1024, 1024
      %32 = vsyncadd [#allocation6], %s31
      %s33 = sshll.u32 [#allocation5], 4
      %s34 = int_to_ptr.vmem [resolvable:$true] %s33
      %39 = dma.hbm_to_vmem [thread:$0]  %s1, 1024, %s34, [#allocation6], 256, 256, 16
    $region9: #{tpu_custom_call.1} parent=1 // pred_fallthru
      _
    // Predicated region
    $region10: #{tpu_custom_call.1} parent=1 // pred_check
      _
    $region11: #{tpu_custom_call.1} parent=1 // pred_check_branch
      %41 = sbr.rel (0) target = $region13
    $region12: #{tpu_custom_call.1} parent=1 // pred_region
      _
    $region13: #{tpu_custom_call.1} parent=1 // pred_fallthru
      _
    // Predicated region
    $region14: #{tpu_custom_call.1} parent=1 // pred_check
      _
    $region15: #{tpu_custom_call.1} parent=1 // pred_check_branch
      %43 = sbr.rel (0) target = $region17
    $region16: #{tpu_custom_call.1} parent=1 // pred_region
      %s45 = ssub.s32 16384, 16384
      %46 = vsyncadd [#allocation6], %s45
      %s47 = sshll.u32 [#allocation7], 4
      %s48 = int_to_ptr.vmem [resolvable:$true] %s47
      %53 = dma.hbm_to_vmem [thread:$0]  %s3, 16384, %s48, [#allocation6], 256, 256, 16
    $region17: #{tpu_custom_call.1} parent=1 // pred_fallthru
      _
    // Predicated region
    $region18: #{tpu_custom_call.1} parent=1 // pred_check
      _
    $region19: #{tpu_custom_call.1} parent=1 // pred_check_branch
      %55 = sbr.rel (0) target = $region21
    $region20: #{tpu_custom_call.1} parent=1 // pred_region
      _
    $region21: #{tpu_custom_call.1} parent=1 // pred_fallthru
      _
    // Predicated region
    $region22: #{tpu_custom_call.1} parent=1 // pred_check
      _
    $region23: #{tpu_custom_call.1} parent=1 // pred_check_branch
      %57 = sbr.rel (0) target = $region25
    $region24: #{tpu_custom_call.1} parent=1 // pred_region
      _
    $region25: #{tpu_custom_call.1} parent=1 // pred_fallthru
      _
    // Predicated region
    $region26: #{tpu_custom_call.1} parent=1 // pred_check
      _
    $region27: #{tpu_custom_call.1} parent=1 // pred_check_branch
      %59 = sbr.rel (0) target = $region29
    $region28: #{tpu_custom_call.1} parent=1 // pred_region
      _
    $region29: #{tpu_custom_call.1} parent=1 // pred_fallthru
      _
    // Predicated region
    $region30: #{tpu_custom_call.1} parent=1 // pred_check
      _
    $region31: #{tpu_custom_call.1} parent=1 // pred_check_branch
      %61 = sbr.rel (0) target = $region33
    $region32: #{tpu_custom_call.1} parent=1 // pred_region
      %s63 = ssub.s32 8192, 8192
      %64 = vsyncadd [#allocation9], %s63
      %s65 = sshll.u32 [#allocation8], 4
      %s66 = int_to_ptr.vmem [resolvable:$true] %s65
      %71 = dma.hbm_to_vmem [thread:$0]  %s7, 8192, %s66, [#allocation9], 128, 128, 8
    $region33: #{tpu_custom_call.1} parent=1 // pred_fallthru
      _
    // Predicated region
    $region34: #{tpu_custom_call.1} parent=1 // pred_check
      _
    $region35: #{tpu_custom_call.1} parent=1 // pred_check_branch
      %73 = sbr.rel (0) target = $region37
    $region36: #{tpu_custom_call.1} parent=1 // pred_region
      _
    $region37: #{tpu_custom_call.1} parent=1 // pred_fallthru
      _
    // Predicated region
    $region38: #{tpu_custom_call.1} parent=1 // pred_check
      _
    $region39: #{tpu_custom_call.1} parent=1 // pred_check_branch
      %75 = sbr.rel (0) target = $region41
    $region40: #{tpu_custom_call.1} parent=1 // pred_region
      %76 = dma.done [#allocation3], 128
    $region41: #{tpu_custom_call.1} parent=1 // pred_fallthru
      _
    // Predicated region
    $region42: #{tpu_custom_call.1} parent=1 // pred_check
      _
    $region43: #{tpu_custom_call.1} parent=1 // pred_check_branch
      %78 = sbr.rel (0) target = $region45
    $region44: #{tpu_custom_call.1} parent=1 // pred_region
      %79 = dma.done [#allocation6], 1024
    $region45: #{tpu_custom_call.1} parent=1 // pred_fallthru
      _
    // Predicated region
    $region46: #{tpu_custom_call.1} parent=1 // pred_check
      _
    $region47: #{tpu_custom_call.1} parent=1 // pred_check_branch
      %81 = sbr.rel (0) target = $region49
    $region48: #{tpu_custom_call.1} parent=1 // pred_region
      %82 = dma.done [#allocation6], 16384
    $region49: #{tpu_custom_call.1} parent=1 // pred_fallthru
      _
    // Predicated region
    $region50: #{tpu_custom_call.1} parent=1 // pred_check
      _
    $region51: #{tpu_custom_call.1} parent=1 // pred_check_branch
      %84 = sbr.rel (0) target = $region53
    $region52: #{tpu_custom_call.1} parent=1 // pred_region
      %85 = dma.done [#allocation9], 8192
    $region53: #{tpu_custom_call.1} parent=1 // pred_fallthru
      _
    %v87 = vld [vmem:[#allocation2] sm:$0xff]
    %v88 = vpack.c.bf16 %v87, %v87
    %v89 = vld [vmem:[#allocation5] sm:$0xff]
    %v90 = vld [vmem:[#allocation5 + $0x8] sm:$0xff]
    %v91 = vld [vmem:[#allocation5 + $0x10] sm:$0xff]
    %v92 = vld [vmem:[#allocation5 + $0x18] sm:$0xff]
    %v93 = vld [vmem:[#allocation5 + $0x20] sm:$0xff]
    %v94 = vld [vmem:[#allocation5 + $0x28] sm:$0xff]
    %v95 = vld [vmem:[#allocation5 + $0x30] sm:$0xff]
    %v96 = vld [vmem:[#allocation5 + $0x38] sm:$0xff]
    %v97 = vld [vmem:[%s2] sm:$0xf]
    %v99 = vlaneseq
    %v100 = vshrl.u32 %v99, 7
    %v101 = vsub.s32 0, %v100
    %v102 = vrot.slane %v97, %v101
    %v103 = vlaneseq
    %v104 = vshrl.u32 %v103, 7
    %v105 = vsub.s32 1, %v104
    %v106 = vrot.slane %v97, %v105
    %v107 = vlaneseq
    %v108 = vshrl.u32 %v107, 7
    %v109 = vsub.s32 2, %v108
    %v110 = vrot.slane %v97, %v109
    %v111 = vlaneseq
    %v112 = vshrl.u32 %v111, 7
    %v113 = vsub.s32 3, %v112
    %v114 = vrot.slane %v97, %v113
    %v127 = vunpack.c.l.b16 %v89
    %v128 = vunpack.c.h.b16 %v89
    %v129 = vunpack.c.l.b16 %v90
    %v130 = vunpack.c.h.b16 %v90
    %v131 = vunpack.c.l.b16 %v91
    %v132 = vunpack.c.h.b16 %v91
    %v133 = vunpack.c.l.b16 %v92
    %v134 = vunpack.c.h.b16 %v92
    %v135 = vunpack.c.l.b16 %v93
    %v136 = vunpack.c.h.b16 %v93
    %v137 = vunpack.c.l.b16 %v94
    %v138 = vunpack.c.h.b16 %v94
    %v139 = vunpack.c.l.b16 %v95
    %v140 = vunpack.c.h.b16 %v95
    %v141 = vunpack.c.l.b16 %v96
    %v142 = vunpack.c.h.b16 %v96
    %v143 = vpack.c.b16 %v131, %v127
    %v144 = vpack.c.b16 %v132, %v128
    %v145 = vpack.c.b16 %v133, %v129
    %v146 = vpack.c.b16 %v134, %v130
    %v147 = vpack.c.b16 %v139, %v135
    %v148 = vpack.c.b16 %v140, %v136
    %v149 = vpack.c.b16 %v141, %v137
    %v150 = vpack.c.b16 %v142, %v138
    %vm159 = vcmask 261120
    %v161 = vsel %vm159, %v88, 0
    %163 = vmatprep.subr.bf16.mxu0 %v144
    %164 = vmatpush1.bf16.msra.mxu0 %v143
    %165 = vmatprep.subr.bf16.mxu0 %v148
    %166 = vmatpush1.bf16.msra.mxu0 %v147
    %167 = vmatprep.subr.bf16.mxu0 0
    %168 = vmatpush1.bf16.msra.mxu0 0
    %169 = vmatprep.subr.bf16.mxu0 0
    %170 = vmatpush1.bf16.msra.mxu0 0
    %171 = vmatprep.subr.bf16.mxu0 0
    %172 = vmatpush1.bf16.msra.mxu0 0
    %173 = vmatprep.subr.bf16.mxu0 0
    %174 = vmatpush1.bf16.msra.mxu0 0
    %175 = vmatprep.subr.bf16.mxu0 0
    %176 = vmatpush1.bf16.msra.mxu0 0
    %177 = vmatprep.subr.bf16.mxu0 0
    %178 = vmatpush1.bf16.msra.mxu0 0
    %179 = vmatprep.subr.bf16.mxu0 0
    %180 = vmatpush1.bf16.msra.mxu0 0
    %181 = vmatprep.subr.bf16.mxu0 0
    %182 = vmatpush1.bf16.msra.mxu0 0
    %183 = vmatprep.subr.bf16.mxu0 0
    %184 = vmatpush1.bf16.msra.mxu0 0
    %185 = vmatprep.subr.bf16.mxu0 0
    %186 = vmatpush1.bf16.msra.mxu0 0
    %187 = vmatprep.subr.bf16.mxu0 0
    %188 = vmatpush1.bf16.msra.mxu0 0
    %189 = vmatprep.subr.bf16.mxu0 0
    %190 = vmatpush1.bf16.msra.mxu0 0
    %191 = vmatprep.subr.bf16.mxu0 0
    %192 = vmatpush1.bf16.msra.mxu0 0
    %193 = vmatprep.subr.bf16.mxu0 0
    %194 = vmatpush1.bf16.msra.mxu0 0
    %195 = vmatprep.mubr.bf16.mxu0 0
    %196 = vmatmul.mubr.bf16.gmra.mrb[0].mxu0 %v161
    %v197 = vpop.f32.mrb[0].mxu0
    %v198 = vadd.f32 %v102, %v197
    %v199 = vpop.f32.mrb[0].mxu0
    %v200 = vadd.f32 %v106, %v199
    %v201 = vpop.f32.mrb[0].mxu0
    %v202 = vpop.f32.mrb[0].mxu0
    %203 = vdwg.mxu0
    %204 = vmatprep.subr.bf16.mxu0 %v146
    %205 = vmatpush1.bf16.msra.mxu0 %v145
    %206 = vmatprep.subr.bf16.mxu0 %v150
    %207 = vmatpush1.bf16.msra.mxu0 %v149
    %208 = vmatprep.subr.bf16.mxu0 0
    %209 = vmatpush1.bf16.msra.mxu0 0
    %210 = vmatprep.subr.bf16.mxu0 0
    %211 = vmatpush1.bf16.msra.mxu0 0
    %212 = vmatprep.subr.bf16.mxu0 0
    %213 = vmatpush1.bf16.msra.mxu0 0
    %214 = vmatprep.subr.bf16.mxu0 0
    %215 = vmatpush1.bf16.msra.mxu0 0
    %216 = vmatprep.subr.bf16.mxu0 0
    %217 = vmatpush1.bf16.msra.mxu0 0
    %218 = vmatprep.subr.bf16.mxu0 0
    %219 = vmatpush1.bf16.msra.mxu0 0
    %220 = vmatprep.subr.bf16.mxu0 0
    %221 = vmatpush1.bf16.msra.mxu0 0
    %222 = vmatprep.subr.bf16.mxu0 0
    %223 = vmatpush1.bf16.msra.mxu0 0
    %224 = vmatprep.subr.bf16.mxu0 0
    %225 = vmatpush1.bf16.msra.mxu0 0
    %226 = vmatprep.subr.bf16.mxu0 0
    %227 = vmatpush1.bf16.msra.mxu0 0
    %228 = vmatprep.subr.bf16.mxu0 0
    %229 = vmatpush1.bf16.msra.mxu0 0
    %230 = vmatprep.subr.bf16.mxu0 0
    %231 = vmatpush1.bf16.msra.mxu0 0
    %232 = vmatprep.subr.bf16.mxu0 0
    %233 = vmatpush1.bf16.msra.mxu0 0
    %234 = vmatprep.subr.bf16.mxu0 0
    %235 = vmatpush1.bf16.msra.mxu0 0
    %236 = vmatprep.mubr.bf16.mxu0 0
    %237 = vmatmul.mubr.bf16.gmra.mrb[0].mxu0 %v161
    %v238 = vpop.f32.mrb[0].mxu0
    %v239 = vadd.f32 %v110, %v238
    %v240 = vpop.f32.mrb[0].mxu0
    %v241 = vadd.f32 %v114, %v240
    %v242 = vpop.f32.mrb[0].mxu0
    %v243 = vpop.f32.mrb[0].mxu0
    %244 = vdwg.mxu0
    %vm245 = vcmp.gt.f32.partialorder %v198, 0.0
    %vm246 = vcmp.gt.f32.partialorder %v200, 0.0
    %vm247 = vcmp.gt.f32.partialorder %v239, 0.0
    %vm248 = vcmp.gt.f32.partialorder %v241, 0.0
    %v249 = vmul.f32 %v198, 0.2
    %v250 = vmul.f32 %v200, 0.2
    %v251 = vmul.f32 %v239, 0.2
    %v252 = vmul.f32 %v241, 0.2
    %v253 = vsel %vm245, %v198, %v249
    %v254 = vsel %vm246, %v200, %v250
    %v255 = vsel %vm247, %v239, %v251
    %v256 = vsel %vm248, %v241, %v252
    %v257 = vpack.c.bf16 %v253, %v253
    %v258 = vpack.c.bf16 %v254, %v254
    %v259 = vpack.c.bf16 %v255, %v255
    %v260 = vpack.c.bf16 %v256, %v256
    %v261 = vld [vmem:[#allocation7] sm:$0xff]
    %v262 = vld [vmem:[#allocation7 + $0x8] sm:$0xff]
    %v263 = vld [vmem:[#allocation7 + $0x10] sm:$0xff]
    %v264 = vld [vmem:[#allocation7 + $0x18] sm:$0xff]
    %v265 = vld [vmem:[#allocation7 + $0x20] sm:$0xff]
    %v266 = vld [vmem:[#allocation7 + $0x28] sm:$0xff]
    %v267 = vld [vmem:[#allocation7 + $0x30] sm:$0xff]
    %v268 = vld [vmem:[#allocation7 + $0x38] sm:$0xff]
    %v269 = vld [vmem:[#allocation7 + $0x40] sm:$0xff]
    %v270 = vld [vmem:[#allocation7 + $0x48] sm:$0xff]
    %v271 = vld [vmem:[#allocation7 + $0x50] sm:$0xff]
    %v272 = vld [vmem:[#allocation7 + $0x58] sm:$0xff]
    %v273 = vld [vmem:[#allocation7 + $0x60] sm:$0xff]
    %v274 = vld [vmem:[#allocation7 + $0x68] sm:$0xff]
    %v275 = vld [vmem:[#allocation7 + $0x70] sm:$0xff]
    %v276 = vld [vmem:[#allocation7 + $0x78] sm:$0xff]
    %v277 = vld [vmem:[#allocation7 + $0x80] sm:$0xff]
    %v278 = vld [vmem:[#allocation7 + $0x88] sm:$0xff]
    %v279 = vld [vmem:[#allocation7 + $0x90] sm:$0xff]
    %v280 = vld [vmem:[#allocation7 + $0x98] sm:$0xff]
    %v281 = vld [vmem:[#allocation7 + $0xa0] sm:$0xff]
    %v282 = vld [vmem:[#allocation7 + $0xa8] sm:$0xff]
    %v283 = vld [vmem:[#allocation7 + $0xb0] sm:$0xff]
    %v284 = vld [vmem:[#allocation7 + $0xb8] sm:$0xff]
    %v285 = vld [vmem:[#allocation7 + $0xc0] sm:$0xff]
    %v286 = vld [vmem:[#allocation7 + $0xc8] sm:$0xff]
    %v287 = vld [vmem:[#allocation7 + $0xd0] sm:$0xff]
    %v288 = vld [vmem:[#allocation7 + $0xd8] sm:$0xff]
    %v289 = vld [vmem:[#allocation7 + $0xe0] sm:$0xff]
    %v290 = vld [vmem:[#allocation7 + $0xe8] sm:$0xff]
    %v291 = vld [vmem:[#allocation7 + $0xf0] sm:$0xff]
    %v292 = vld [vmem:[#allocation7 + $0xf8] sm:$0xff]
    %v293 = vld [vmem:[#allocation7 + $0x100] sm:$0xff]
    %v294 = vld [vmem:[#allocation7 + $0x108] sm:$0xff]
    %v295 = vld [vmem:[#allocation7 + $0x110] sm:$0xff]
    %v296 = vld [vmem:[#allocation7 + $0x118] sm:$0xff]
    %v297 = vld [vmem:[#allocation7 + $0x120] sm:$0xff]
    %v298 = vld [vmem:[#allocation7 + $0x128] sm:$0xff]
    %v299 = vld [vmem:[#allocation7 + $0x130] sm:$0xff]
    %v300 = vld [vmem:[#allocation7 + $0x138] sm:$0xff]
    %v301 = vld [vmem:[#allocation7 + $0x140] sm:$0xff]
    %v302 = vld [vmem:[#allocation7 + $0x148] sm:$0xff]
    %v303 = vld [vmem:[#allocation7 + $0x150] sm:$0xff]
    %v304 = vld [vmem:[#allocation7 + $0x158] sm:$0xff]
    %v305 = vld [vmem:[#allocation7 + $0x160] sm:$0xff]
    %v306 = vld [vmem:[#allocation7 + $0x168] sm:$0xff]
    %v307 = vld [vmem:[#allocation7 + $0x170] sm:$0xff]
    %v308 = vld [vmem:[#allocation7 + $0x178] sm:$0xff]
    %v309 = vld [vmem:[#allocation7 + $0x180] sm:$0xff]
    %v310 = vld [vmem:[#allocation7 + $0x188] sm:$0xff]
    %v311 = vld [vmem:[#allocation7 + $0x190] sm:$0xff]
    %v312 = vld [vmem:[#allocation7 + $0x198] sm:$0xff]
    %v313 = vld [vmem:[#allocation7 + $0x1a0] sm:$0xff]
    %v314 = vld [vmem:[#allocation7 + $0x1a8] sm:$0xff]
    %v315 = vld [vmem:[#allocation7 + $0x1b0] sm:$0xff]
    %v316 = vld [vmem:[#allocation7 + $0x1b8] sm:$0xff]
    %v317 = vld [vmem:[#allocation7 + $0x1c0] sm:$0xff]
    %v318 = vld [vmem:[#allocation7 + $0x1c8] sm:$0xff]
    %v319 = vld [vmem:[#allocation7 + $0x1d0] sm:$0xff]
    %v320 = vld [vmem:[#allocation7 + $0x1d8] sm:$0xff]
    %v321 = vld [vmem:[#allocation7 + $0x1e0] sm:$0xff]
    %v322 = vld [vmem:[#allocation7 + $0x1e8] sm:$0xff]
    %v323 = vld [vmem:[#allocation7 + $0x1f0] sm:$0xff]
    %v324 = vld [vmem:[#allocation7 + $0x1f8] sm:$0xff]
    %v325 = vld [vmem:[#allocation7 + $0x200] sm:$0xff]
    %v326 = vld [vmem:[#allocation7 + $0x208] sm:$0xff]
    %v327 = vld [vmem:[#allocation7 + $0x210] sm:$0xff]
    %v328 = vld [vmem:[#allocation7 + $0x218] sm:$0xff]
    %v329 = vld [vmem:[#allocation7 + $0x220] sm:$0xff]
    %v330 = vld [vmem:[#allocation7 + $0x228] sm:$0xff]
    %v331 = vld [vmem:[#allocation7 + $0x230] sm:$0xff]
    %v332 = vld [vmem:[#allocation7 + $0x238] sm:$0xff]
    %v333 = vld [vmem:[#allocation7 + $0x240] sm:$0xff]
    %v334 = vld [vmem:[#allocation7 + $0x248] sm:$0xff]
    %v335 = vld [vmem:[#allocation7 + $0x250] sm:$0xff]
    %v336 = vld [vmem:[#allocation7 + $0x258] sm:$0xff]
    %v337 = vld [vmem:[#allocation7 + $0x260] sm:$0xff]
    %v338 = vld [vmem:[#allocation7 + $0x268] sm:$0xff]
    %v339 = vld [vmem:[#allocation7 + $0x270] sm:$0xff]
    %v340 = vld [vmem:[#allocation7 + $0x278] sm:$0xff]
    %v341 = vld [vmem:[#allocation7 + $0x280] sm:$0xff]
    %v342 = vld [vmem:[#allocation7 + $0x288] sm:$0xff]
    %v343 = vld [vmem:[#allocation7 + $0x290] sm:$0xff]
    %v344 = vld [vmem:[#allocation7 + $0x298] sm:$0xff]
    %v345 = vld [vmem:[#allocation7 + $0x2a0] sm:$0xff]
    %v346 = vld [vmem:[#allocation7 + $0x2a8] sm:$0xff]
    %v347 = vld [vmem:[#allocation7 + $0x2b0] sm:$0xff]
    %v348 = vld [vmem:[#allocation7 + $0x2b8] sm:$0xff]
    %v349 = vld [vmem:[#allocation7 + $0x2c0] sm:$0xff]
    %v350 = vld [vmem:[#allocation7 + $0x2c8] sm:$0xff]
    %v351 = vld [vmem:[#allocation7 + $0x2d0] sm:$0xff]
    %v352 = vld [vmem:[#allocation7 + $0x2d8] sm:$0xff]
    %v353 = vld [vmem:[#allocation7 + $0x2e0] sm:$0xff]
    %v354 = vld [vmem:[#allocation7 + $0x2e8] sm:$0xff]
    %v355 = vld [vmem:[#allocation7 + $0x2f0] sm:$0xff]
    %v356 = vld [vmem:[#allocation7 + $0x2f8] sm:$0xff]
    %v357 = vld [vmem:[#allocation7 + $0x300] sm:$0xff]
    %v358 = vld [vmem:[#allocation7 + $0x308] sm:$0xff]
    %v359 = vld [vmem:[#allocation7 + $0x310] sm:$0xff]
    %v360 = vld [vmem:[#allocation7 + $0x318] sm:$0xff]
    %v361 = vld [vmem:[#allocation7 + $0x320] sm:$0xff]
    %v362 = vld [vmem:[#allocation7 + $0x328] sm:$0xff]
    %v363 = vld [vmem:[#allocation7 + $0x330] sm:$0xff]
    %v364 = vld [vmem:[#allocation7 + $0x338] sm:$0xff]
    %v365 = vld [vmem:[#allocation7 + $0x340] sm:$0xff]
    %v366 = vld [vmem:[#allocation7 + $0x348] sm:$0xff]
    %v367 = vld [vmem:[#allocation7 + $0x350] sm:$0xff]
    %v368 = vld [vmem:[#allocation7 + $0x358] sm:$0xff]
    %v369 = vld [vmem:[#allocation7 + $0x360] sm:$0xff]
    %v370 = vld [vmem:[#allocation7 + $0x368] sm:$0xff]
    %v371 = vld [vmem:[#allocation7 + $0x370] sm:$0xff]
    %v372 = vld [vmem:[#allocation7 + $0x378] sm:$0xff]
    %v373 = vld [vmem:[#allocation7 + $0x380] sm:$0xff]
    %v374 = vld [vmem:[#allocation7 + $0x388] sm:$0xff]
    %v375 = vld [vmem:[#allocation7 + $0x390] sm:$0xff]
    %v376 = vld [vmem:[#allocation7 + $0x398] sm:$0xff]
    %v377 = vld [vmem:[#allocation7 + $0x3a0] sm:$0xff]
    %v378 = vld [vmem:[#allocation7 + $0x3a8] sm:$0xff]
    %v379 = vld [vmem:[#allocation7 + $0x3b0] sm:$0xff]
    %v380 = vld [vmem:[#allocation7 + $0x3b8] sm:$0xff]
    %v381 = vld [vmem:[#allocation7 + $0x3c0] sm:$0xff]
    %v382 = vld [vmem:[#allocation7 + $0x3c8] sm:$0xff]
    %v383 = vld [vmem:[#allocation7 + $0x3d0] sm:$0xff]
    %v384 = vld [vmem:[#allocation7 + $0x3d8] sm:$0xff]
    %v385 = vld [vmem:[#allocation7 + $0x3e0] sm:$0xff]
    %v386 = vld [vmem:[#allocation7 + $0x3e8] sm:$0xff]
    %v387 = vld [vmem:[#allocation7 + $0x3f0] sm:$0xff]
    %v388 = vld [vmem:[#allocation7 + $0x3f8] sm:$0xff]
    %v389 = vld [vmem:[%s4] sm:$0xf]
    %v391 = vlaneseq
    %v392 = vshrl.u32 %v391, 7
    %v393 = vsub.s32 0, %v392
    %v394 = vrot.slane %v389, %v393
    %v395 = vlaneseq
    %v396 = vshrl.u32 %v395, 7
    %v397 = vsub.s32 1, %v396
    %v398 = vrot.slane %v389, %v397
    %v399 = vlaneseq
    %v400 = vshrl.u32 %v399, 7
    %v401 = vsub.s32 2, %v400
    %v402 = vrot.slane %v389, %v401
    %v403 = vlaneseq
    %v404 = vshrl.u32 %v403, 7
    %v405 = vsub.s32 3, %v404
    %v406 = vrot.slane %v389, %v405
    %v539 = vunpack.c.l.b16 %v261
    %v540 = vunpack.c.h.b16 %v261
    %v541 = vunpack.c.l.b16 %v262
    %v542 = vunpack.c.h.b16 %v262
    %v543 = vunpack.c.l.b16 %v263
    %v544 = vunpack.c.h.b16 %v263
    %v545 = vunpack.c.l.b16 %v264
    %v546 = vunpack.c.h.b16 %v264
    %v547 = vunpack.c.l.b16 %v265
    %v548 = vunpack.c.h.b16 %v265
    %v549 = vunpack.c.l.b16 %v266
    %v550 = vunpack.c.h.b16 %v266
    %v551 = vunpack.c.l.b16 %v267
    %v552 = vunpack.c.h.b16 %v267
    %v553 = vunpack.c.l.b16 %v268
    %v554 = vunpack.c.h.b16 %v268
    %v555 = vunpack.c.l.b16 %v269
    %v556 = vunpack.c.h.b16 %v269
    %v557 = vunpack.c.l.b16 %v270
    %v558 = vunpack.c.h.b16 %v270
    %v559 = vunpack.c.l.b16 %v271
    %v560 = vunpack.c.h.b16 %v271
    %v561 = vunpack.c.l.b16 %v272
    %v562 = vunpack.c.h.b16 %v272
    %v563 = vunpack.c.l.b16 %v273
    %v564 = vunpack.c.h.b16 %v273
    %v565 = vunpack.c.l.b16 %v274
    %v566 = vunpack.c.h.b16 %v274
    %v567 = vunpack.c.l.b16 %v275
    %v568 = vunpack.c.h.b16 %v275
    %v569 = vunpack.c.l.b16 %v276
    %v570 = vunpack.c.h.b16 %v276
    %v571 = vunpack.c.l.b16 %v277
    %v572 = vunpack.c.h.b16 %v277
    %v573 = vunpack.c.l.b16 %v278
    %v574 = vunpack.c.h.b16 %v278
    %v575 = vunpack.c.l.b16 %v279
    %v576 = vunpack.c.h.b16 %v279
    %v577 = vunpack.c.l.b16 %v280
    %v578 = vunpack.c.h.b16 %v280
    %v579 = vunpack.c.l.b16 %v281
    %v580 = vunpack.c.h.b16 %v281
    %v581 = vunpack.c.l.b16 %v282
    %v582 = vunpack.c.h.b16 %v282
    %v583 = vunpack.c.l.b16 %v283
    %v584 = vunpack.c.h.b16 %v283
    %v585 = vunpack.c.l.b16 %v284
    %v586 = vunpack.c.h.b16 %v284
    %v587 = vunpack.c.l.b16 %v285
    %v588 = vunpack.c.h.b16 %v285
    %v589 = vunpack.c.l.b16 %v286
    %v590 = vunpack.c.h.b16 %v286
    %v591 = vunpack.c.l.b16 %v287
    %v592 = vunpack.c.h.b16 %v287
    %v593 = vunpack.c.l.b16 %v288
    %v594 = vunpack.c.h.b16 %v288
    %v595 = vunpack.c.l.b16 %v289
    %v596 = vunpack.c.h.b16 %v289
    %v597 = vunpack.c.l.b16 %v290
    %v598 = vunpack.c.h.b16 %v290
    %v599 = vunpack.c.l.b16 %v291
    %v600 = vunpack.c.h.b16 %v291
    %v601 = vunpack.c.l.b16 %v292
    %v602 = vunpack.c.h.b16 %v292
    %v603 = vunpack.c.l.b16 %v293
    %v604 = vunpack.c.h.b16 %v293
    %v605 = vunpack.c.l.b16 %v294
    %v606 = vunpack.c.h.b16 %v294
    %v607 = vunpack.c.l.b16 %v295
    %v608 = vunpack.c.h.b16 %v295
    %v609 = vunpack.c.l.b16 %v296
    %v610 = vunpack.c.h.b16 %v296
    %v611 = vunpack.c.l.b16 %v297
    %v612 = vunpack.c.h.b16 %v297
    %v613 = vunpack.c.l.b16 %v298
    %v614 = vunpack.c.h.b16 %v298
    %v615 = vunpack.c.l.b16 %v299
    %v616 = vunpack.c.h.b16 %v299
    %v617 = vunpack.c.l.b16 %v300
    %v618 = vunpack.c.h.b16 %v300
    %v619 = vunpack.c.l.b16 %v301
    %v620 = vunpack.c.h.b16 %v301
    %v621 = vunpack.c.l.b16 %v302
    %v622 = vunpack.c.h.b16 %v302
    %v623 = vunpack.c.l.b16 %v303
    %v624 = vunpack.c.h.b16 %v303
    %v625 = vunpack.c.l.b16 %v304
    %v626 = vunpack.c.h.b16 %v304
    %v627 = vunpack.c.l.b16 %v305
    %v628 = vunpack.c.h.b16 %v305
    %v629 = vunpack.c.l.b16 %v306
    %v630 = vunpack.c.h.b16 %v306
    %v631 = vunpack.c.l.b16 %v307
    %v632 = vunpack.c.h.b16 %v307
    %v633 = vunpack.c.l.b16 %v308
    %v634 = vunpack.c.h.b16 %v308
    %v635 = vunpack.c.l.b16 %v309
    %v636 = vunpack.c.h.b16 %v309
    %v637 = vunpack.c.l.b16 %v310
    %v638 = vunpack.c.h.b16 %v310
    %v639 = vunpack.c.l.b16 %v311
    %v640 = vunpack.c.h.b16 %v311
    %v641 = vunpack.c.l.b16 %v312
    %v642 = vunpack.c.h.b16 %v312
    %v643 = vunpack.c.l.b16 %v313
    %v644 = vunpack.c.h.b16 %v313
    %v645 = vunpack.c.l.b16 %v314
    %v646 = vunpack.c.h.b16 %v314
    %v647 = vunpack.c.l.b16 %v315
    %v648 = vunpack.c.h.b16 %v315
    %v649 = vunpack.c.l.b16 %v316
    %v650 = vunpack.c.h.b16 %v316
    %v651 = vunpack.c.l.b16 %v317
    %v652 = vunpack.c.h.b16 %v317
    %v653 = vunpack.c.l.b16 %v318
    %v654 = vunpack.c.h.b16 %v318
    %v655 = vunpack.c.l.b16 %v319
    %v656 = vunpack.c.h.b16 %v319
    %v657 = vunpack.c.l.b16 %v320
    %v658 = vunpack.c.h.b16 %v320
    %v659 = vunpack.c.l.b16 %v321
    %v660 = vunpack.c.h.b16 %v321
    %v661 = vunpack.c.l.b16 %v322
    %v662 = vunpack.c.h.b16 %v322
    %v663 = vunpack.c.l.b16 %v323
    %v664 = vunpack.c.h.b16 %v323
    %v665 = vunpack.c.l.b16 %v324
    %v666 = vunpack.c.h.b16 %v324
    %v667 = vunpack.c.l.b16 %v325
    %v668 = vunpack.c.h.b16 %v325
    %v669 = vunpack.c.l.b16 %v326
    %v670 = vunpack.c.h.b16 %v326
    %v671 = vunpack.c.l.b16 %v327
    %v672 = vunpack.c.h.b16 %v327
    %v673 = vunpack.c.l.b16 %v328
    %v674 = vunpack.c.h.b16 %v328
    %v675 = vunpack.c.l.b16 %v329
    %v676 = vunpack.c.h.b16 %v329
    %v677 = vunpack.c.l.b16 %v330
    %v678 = vunpack.c.h.b16 %v330
    %v679 = vunpack.c.l.b16 %v331
    %v680 = vunpack.c.h.b16 %v331
    %v681 = vunpack.c.l.b16 %v332
    %v682 = vunpack.c.h.b16 %v332
    %v683 = vunpack.c.l.b16 %v333
    %v684 = vunpack.c.h.b16 %v333
    %v685 = vunpack.c.l.b16 %v334
    %v686 = vunpack.c.h.b16 %v334
    %v687 = vunpack.c.l.b16 %v335
    %v688 = vunpack.c.h.b16 %v335
    %v689 = vunpack.c.l.b16 %v336
    %v690 = vunpack.c.h.b16 %v336
    %v691 = vunpack.c.l.b16 %v337
    %v692 = vunpack.c.h.b16 %v337
    %v693 = vunpack.c.l.b16 %v338
    %v694 = vunpack.c.h.b16 %v338
    %v695 = vunpack.c.l.b16 %v339
    %v696 = vunpack.c.h.b16 %v339
    %v697 = vunpack.c.l.b16 %v340
    %v698 = vunpack.c.h.b16 %v340
    %v699 = vunpack.c.l.b16 %v341
    %v700 = vunpack.c.h.b16 %v341
    %v701 = vunpack.c.l.b16 %v342
    %v702 = vunpack.c.h.b16 %v342
    %v703 = vunpack.c.l.b16 %v343
    %v704 = vunpack.c.h.b16 %v343
    %v705 = vunpack.c.l.b16 %v344
    %v706 = vunpack.c.h.b16 %v344
    %v707 = vunpack.c.l.b16 %v345
    %v708 = vunpack.c.h.b16 %v345
    %v709 = vunpack.c.l.b16 %v346
    %v710 = vunpack.c.h.b16 %v346
    %v711 = vunpack.c.l.b16 %v347
    %v712 = vunpack.c.h.b16 %v347
    %v713 = vunpack.c.l.b16 %v348
    %v714 = vunpack.c.h.b16 %v348
    %v715 = vunpack.c.l.b16 %v349
    %v716 = vunpack.c.h.b16 %v349
    %v717 = vunpack.c.l.b16 %v350
    %v718 = vunpack.c.h.b16 %v350
    %v719 = vunpack.c.l.b16 %v351
    %v720 = vunpack.c.h.b16 %v351
    %v721 = vunpack.c.l.b16 %v352
    %v722 = vunpack.c.h.b16 %v352
    %v723 = vunpack.c.l.b16 %v353
    %v724 = vunpack.c.h.b16 %v353
    %v725 = vunpack.c.l.b16 %v354
    %v726 = vunpack.c.h.b16 %v354
    %v727 = vunpack.c.l.b16 %v355
    %v728 = vunpack.c.h.b16 %v355
    %v729 = vunpack.c.l.b16 %v356
    %v730 = vunpack.c.h.b16 %v356
    %v731 = vunpack.c.l.b16 %v357
    %v732 = vunpack.c.h.b16 %v357
    %v733 = vunpack.c.l.b16 %v358
    %v734 = vunpack.c.h.b16 %v358
    %v735 = vunpack.c.l.b16 %v359
    %v736 = vunpack.c.h.b16 %v359
    %v737 = vunpack.c.l.b16 %v360
    %v738 = vunpack.c.h.b16 %v360
    %v739 = vunpack.c.l.b16 %v361
    %v740 = vunpack.c.h.b16 %v361
    %v741 = vunpack.c.l.b16 %v362
    %v742 = vunpack.c.h.b16 %v362
    %v743 = vunpack.c.l.b16 %v363
    %v744 = vunpack.c.h.b16 %v363
    %v745 = vunpack.c.l.b16 %v364
    %v746 = vunpack.c.h.b16 %v364
    %v747 = vunpack.c.l.b16 %v365
    %v748 = vunpack.c.h.b16 %v365
    %v749 = vunpack.c.l.b16 %v366
    %v750 = vunpack.c.h.b16 %v366
    %v751 = vunpack.c.l.b16 %v367
    %v752 = vunpack.c.h.b16 %v367
    %v753 = vunpack.c.l.b16 %v368
    %v754 = vunpack.c.h.b16 %v368
    %v755 = vunpack.c.l.b16 %v369
    %v756 = vunpack.c.h.b16 %v369
    %v757 = vunpack.c.l.b16 %v370
    %v758 = vunpack.c.h.b16 %v370
    %v759 = vunpack.c.l.b16 %v371
    %v760 = vunpack.c.h.b16 %v371
    %v761 = vunpack.c.l.b16 %v372
    %v762 = vunpack.c.h.b16 %v372
    %v763 = vunpack.c.l.b16 %v373
    %v764 = vunpack.c.h.b16 %v373
    %v765 = vunpack.c.l.b16 %v374
    %v766 = vunpack.c.h.b16 %v374
    %v767 = vunpack.c.l.b16 %v375
    %v768 = vunpack.c.h.b16 %v375
    %v769 = vunpack.c.l.b16 %v376
    %v770 = vunpack.c.h.b16 %v376
    %v771 = vunpack.c.l.b16 %v377
    %v772 = vunpack.c.h.b16 %v377
    %v773 = vunpack.c.l.b16 %v378
    %v774 = vunpack.c.h.b16 %v378
    %v775 = vunpack.c.l.b16 %v379
    %v776 = vunpack.c.h.b16 %v379
    %v777 = vunpack.c.l.b16 %v380
    %v778 = vunpack.c.h.b16 %v380
    %v779 = vunpack.c.l.b16 %v381
    %v780 = vunpack.c.h.b16 %v381
    %v781 = vunpack.c.l.b16 %v382
    %v782 = vunpack.c.h.b16 %v382
    %v783 = vunpack.c.l.b16 %v383
    %v784 = vunpack.c.h.b16 %v383
    %v785 = vunpack.c.l.b16 %v384
    %v786 = vunpack.c.h.b16 %v384
    %v787 = vunpack.c.l.b16 %v385
    %v788 = vunpack.c.h.b16 %v385
    %v789 = vunpack.c.l.b16 %v386
    %v790 = vunpack.c.h.b16 %v386
    %v791 = vunpack.c.l.b16 %v387
    %v792 = vunpack.c.h.b16 %v387
    %v793 = vunpack.c.l.b16 %v388
    %v794 = vunpack.c.h.b16 %v388
    %v795 = vpack.c.b16 %v543, %v539
    %v796 = vpack.c.b16 %v544, %v540
    %v797 = vpack.c.b16 %v545, %v541
    %v798 = vpack.c.b16 %v546, %v542
    %v799 = vpack.c.b16 %v551, %v547
    %v800 = vpack.c.b16 %v552, %v548
    %v801 = vpack.c.b16 %v553, %v549
    %v802 = vpack.c.b16 %v554, %v550
    %v803 = vpack.c.b16 %v559, %v555
    %v804 = vpack.c.b16 %v560, %v556
    %v805 = vpack.c.b16 %v561, %v557
    %v806 = vpack.c.b16 %v562, %v558
    %v807 = vpack.c.b16 %v567, %v563
    %v808 = vpack.c.b16 %v568, %v564
    %v809 = vpack.c.b16 %v569, %v565
    %v810 = vpack.c.b16 %v570, %v566
    %v811 = vpack.c.b16 %v575, %v571
    %v812 = vpack.c.b16 %v576, %v572
    %v813 = vpack.c.b16 %v577, %v573
    %v814 = vpack.c.b16 %v578, %v574
    %v815 = vpack.c.b16 %v583, %v579
    %v816 = vpack.c.b16 %v584, %v580
    %v817 = vpack.c.b16 %v585, %v581
    %v818 = vpack.c.b16 %v586, %v582
    %v819 = vpack.c.b16 %v591, %v587
    %v820 = vpack.c.b16 %v592, %v588
    %v821 = vpack.c.b16 %v593, %v589
    %v822 = vpack.c.b16 %v594, %v590
    %v823 = vpack.c.b16 %v599, %v595
    %v824 = vpack.c.b16 %v600, %v596
    %v825 = vpack.c.b16 %v601, %v597
    %v826 = vpack.c.b16 %v602, %v598
    %v827 = vpack.c.b16 %v607, %v603
    %v828 = vpack.c.b16 %v608, %v604
    %v829 = vpack.c.b16 %v609, %v605
    %v830 = vpack.c.b16 %v610, %v606
    %v831 = vpack.c.b16 %v615, %v611
    %v832 = vpack.c.b16 %v616, %v612
    %v833 = vpack.c.b16 %v617, %v613
    %v834 = vpack.c.b16 %v618, %v614
    %v835 = vpack.c.b16 %v623, %v619
    %v836 = vpack.c.b16 %v624, %v620
    %v837 = vpack.c.b16 %v625, %v621
    %v838 = vpack.c.b16 %v626, %v622
    %v839 = vpack.c.b16 %v631, %v627
    %v840 = vpack.c.b16 %v632, %v628
    %v841 = vpack.c.b16 %v633, %v629
    %v842 = vpack.c.b16 %v634, %v630
    %v843 = vpack.c.b16 %v639, %v635
    %v844 = vpack.c.b16 %v640, %v636
    %v845 = vpack.c.b16 %v641, %v637
    %v846 = vpack.c.b16 %v642, %v638
    %v847 = vpack.c.b16 %v647, %v643
    %v848 = vpack.c.b16 %v648, %v644
    %v849 = vpack.c.b16 %v649, %v645
    %v850 = vpack.c.b16 %v650, %v646
    %v851 = vpack.c.b16 %v655, %v651
    %v852 = vpack.c.b16 %v656, %v652
    %v853 = vpack.c.b16 %v657, %v653
    %v854 = vpack.c.b16 %v658, %v654
    %v855 = vpack.c.b16 %v663, %v659
    %v856 = vpack.c.b16 %v664, %v660
    %v857 = vpack.c.b16 %v665, %v661
    %v858 = vpack.c.b16 %v666, %v662
    %v859 = vpack.c.b16 %v671, %v667
    %v860 = vpack.c.b16 %v672, %v668
    %v861 = vpack.c.b16 %v673, %v669
    %v862 = vpack.c.b16 %v674, %v670
    %v863 = vpack.c.b16 %v679, %v675
    %v864 = vpack.c.b16 %v680, %v676
    %v865 = vpack.c.b16 %v681, %v677
    %v866 = vpack.c.b16 %v682, %v678
    %v867 = vpack.c.b16 %v687, %v683
    %v868 = vpack.c.b16 %v688, %v684
    %v869 = vpack.c.b16 %v689, %v685
    %v870 = vpack.c.b16 %v690, %v686
    %v871 = vpack.c.b16 %v695, %v691
    %v872 = vpack.c.b16 %v696, %v692
    %v873 = vpack.c.b16 %v697, %v693
    %v874 = vpack.c.b16 %v698, %v694
    %v875 = vpack.c.b16 %v703, %v699
    %v876 = vpack.c.b16 %v704, %v700
    %v877 = vpack.c.b16 %v705, %v701
    %v878 = vpack.c.b16 %v706, %v702
    %v879 = vpack.c.b16 %v711, %v707
    %v880 = vpack.c.b16 %v712, %v708
    %v881 = vpack.c.b16 %v713, %v709
    %v882 = vpack.c.b16 %v714, %v710
    %v883 = vpack.c.b16 %v719, %v715
    %v884 = vpack.c.b16 %v720, %v716
    %v885 = vpack.c.b16 %v721, %v717
    %v886 = vpack.c.b16 %v722, %v718
    %v887 = vpack.c.b16 %v727, %v723
    %v888 = vpack.c.b16 %v728, %v724
    %v889 = vpack.c.b16 %v729, %v725
    %v890 = vpack.c.b16 %v730, %v726
    %v891 = vpack.c.b16 %v735, %v731
    %v892 = vpack.c.b16 %v736, %v732
    %v893 = vpack.c.b16 %v737, %v733
    %v894 = vpack.c.b16 %v738, %v734
    %v895 = vpack.c.b16 %v743, %v739
    %v896 = vpack.c.b16 %v744, %v740
    %v897 = vpack.c.b16 %v745, %v741
    %v898 = vpack.c.b16 %v746, %v742
    %v899 = vpack.c.b16 %v751, %v747
    %v900 = vpack.c.b16 %v752, %v748
    %v901 = vpack.c.b16 %v753, %v749
    %v902 = vpack.c.b16 %v754, %v750
    %v903 = vpack.c.b16 %v759, %v755
    %v904 = vpack.c.b16 %v760, %v756
    %v905 = vpack.c.b16 %v761, %v757
    %v906 = vpack.c.b16 %v762, %v758
    %v907 = vpack.c.b16 %v767, %v763
    %v908 = vpack.c.b16 %v768, %v764
    %v909 = vpack.c.b16 %v769, %v765
    %v910 = vpack.c.b16 %v770, %v766
    %v911 = vpack.c.b16 %v775, %v771
    %v912 = vpack.c.b16 %v776, %v772
    %v913 = vpack.c.b16 %v777, %v773
    %v914 = vpack.c.b16 %v778, %v774
    %v915 = vpack.c.b16 %v783, %v779
    %v916 = vpack.c.b16 %v784, %v780
    %v917 = vpack.c.b16 %v785, %v781
    %v918 = vpack.c.b16 %v786, %v782
    %v919 = vpack.c.b16 %v791, %v787
    %v920 = vpack.c.b16 %v792, %v788
    %v921 = vpack.c.b16 %v793, %v789
    %v922 = vpack.c.b16 %v794, %v790
    %1051 = vmatprep.subr.bf16.mxu0 %v796
    %1052 = vmatpush1.bf16.msra.mxu0 %v795
    %1053 = vmatprep.subr.bf16.mxu0 %v800
    %1054 = vmatpush1.bf16.msra.mxu0 %v799
    %1055 = vmatprep.subr.bf16.mxu0 %v804
    %1056 = vmatpush1.bf16.msra.mxu0 %v803
    %1057 = vmatprep.subr.bf16.mxu0 %v808
    %1058 = vmatpush1.bf16.msra.mxu0 %v807
    %1059 = vmatprep.subr.bf16.mxu0 %v812
    %1060 = vmatpush1.bf16.msra.mxu0 %v811
    %1061 = vmatprep.subr.bf16.mxu0 %v816
    %1062 = vmatpush1.bf16.msra.mxu0 %v815
    %1063 = vmatprep.subr.bf16.mxu0 %v820
    %1064 = vmatpush1.bf16.msra.mxu0 %v819
    %1065 = vmatprep.subr.bf16.mxu0 %v824
    %1066 = vmatpush1.bf16.msra.mxu0 %v823
    %1067 = vmatprep.subr.bf16.mxu0 %v828
    %1068 = vmatpush1.bf16.msra.mxu0 %v827
    %1069 = vmatprep.subr.bf16.mxu0 %v832
    %1070 = vmatpush1.bf16.msra.mxu0 %v831
    %1071 = vmatprep.subr.bf16.mxu0 %v836
    %1072 = vmatpush1.bf16.msra.mxu0 %v835
    %1073 = vmatprep.subr.bf16.mxu0 %v840
    %1074 = vmatpush1.bf16.msra.mxu0 %v839
    %1075 = vmatprep.subr.bf16.mxu0 %v844
    %1076 = vmatpush1.bf16.msra.mxu0 %v843
    %1077 = vmatprep.subr.bf16.mxu0 %v848
    %1078 = vmatpush1.bf16.msra.mxu0 %v847
    %1079 = vmatprep.subr.bf16.mxu0 %v852
    %1080 = vmatpush1.bf16.msra.mxu0 %v851
    %1081 = vmatprep.subr.bf16.mxu0 %v856
    %1082 = vmatpush1.bf16.msra.mxu0 %v855
    %1083 = vmatprep.mubr.bf16.mxu0 %v258
    %1084 = vmatmul.mubr.bf16.gmra.mrb[0].mxu0 %v257
    %v1085 = vpop.f32.mrb[0].mxu0
    %v1086 = vadd.f32 %v394, %v1085
    %v1087 = vpop.f32.mrb[0].mxu0
    %v1088 = vadd.f32 %v398, %v1087
    %v1089 = vpop.f32.mrb[0].mxu0
    %v1090 = vpop.f32.mrb[0].mxu0
    %1091 = vdwg.mxu0
    %1092 = vmatprep.subr.bf16.mxu0 %v860
    %1093 = vmatpush1.bf16.msra.mxu0 %v859
    %1094 = vmatprep.subr.bf16.mxu0 %v864
    %1095 = vmatpush1.bf16.msra.mxu0 %v863
    %1096 = vmatprep.subr.bf16.mxu0 %v868
    %1097 = vmatpush1.bf16.msra.mxu0 %v867
    %1098 = vmatprep.subr.bf16.mxu0 %v872
    %1099 = vmatpush1.bf16.msra.mxu0 %v871
    %1100 = vmatprep.subr.bf16.mxu0 %v876
    %1101 = vmatpush1.bf16.msra.mxu0 %v875
    %1102 = vmatprep.subr.bf16.mxu0 %v880
    %1103 = vmatpush1.bf16.msra.mxu0 %v879
    %1104 = vmatprep.subr.bf16.mxu0 %v884
    %1105 = vmatpush1.bf16.msra.mxu0 %v883
    %1106 = vmatprep.subr.bf16.mxu0 %v888
    %1107 = vmatpush1.bf16.msra.mxu0 %v887
    %1108 = vmatprep.subr.bf16.mxu0 %v892
    %1109 = vmatpush1.bf16.msra.mxu0 %v891
    %1110 = vmatprep.subr.bf16.mxu0 %v896
    %1111 = vmatpush1.bf16.msra.mxu0 %v895
    %1112 = vmatprep.subr.bf16.mxu0 %v900
    %1113 = vmatpush1.bf16.msra.mxu0 %v899
    %1114 = vmatprep.subr.bf16.mxu0 %v904
    %1115 = vmatpush1.bf16.msra.mxu0 %v903
    %1116 = vmatprep.subr.bf16.mxu0 %v908
    %1117 = vmatpush1.bf16.msra.mxu0 %v907
    %1118 = vmatprep.subr.bf16.mxu0 %v912
    %1119 = vmatpush1.bf16.msra.mxu0 %v911
    %1120 = vmatprep.subr.bf16.mxu0 %v916
    %1121 = vmatpush1.bf16.msra.mxu0 %v915
    %1122 = vmatprep.subr.bf16.mxu0 %v920
    %1123 = vmatpush1.bf16.msra.mxu0 %v919
    %1124 = vmatprep.mubr.bf16.mxu0 %v260
    %1125 = vmatmul.mubr.bf16.gmra.mrb[0].mxu0 %v259
    %v1126 = vpop.f32.mrb[0].mxu0
    %v1127 = vadd.f32 %v1086, %v1126
    %v1128 = vpop.f32.mrb[0].mxu0
    %v1129 = vadd.f32 %v1088, %v1128
    %v1130 = vpop.f32.mrb[0].mxu0
    %v1131 = vpop.f32.mrb[0].mxu0
    %1132 = vdwg.mxu0
    %1133 = vmatprep.subr.bf16.mxu0 %v798
    %1134 = vmatpush1.bf16.msra.mxu0 %v797
    %1135 = vmatprep.subr.bf16.mxu0 %v802
    %1136 = vmatpush1.bf16.msra.mxu0 %v801
    %1137 = vmatprep.subr.bf16.mxu0 %v806
    %1138 = vmatpush1.bf16.msra.mxu0 %v805
    %1139 = vmatprep.subr.bf16.mxu0 %v810
    %1140 = vmatpush1.bf16.msra.mxu0 %v809
    %1141 = vmatprep.subr.bf16.mxu0 %v814
    %1142 = vmatpush1.bf16.msra.mxu0 %v813
    %1143 = vmatprep.subr.bf16.mxu0 %v818
    %1144 = vmatpush1.bf16.msra.mxu0 %v817
    %1145 = vmatprep.subr.bf16.mxu0 %v822
    %1146 = vmatpush1.bf16.msra.mxu0 %v821
    %1147 = vmatprep.subr.bf16.mxu0 %v826
    %1148 = vmatpush1.bf16.msra.mxu0 %v825
    %1149 = vmatprep.subr.bf16.mxu0 %v830
    %1150 = vmatpush1.bf16.msra.mxu0 %v829
    %1151 = vmatprep.subr.bf16.mxu0 %v834
    %1152 = vmatpush1.bf16.msra.mxu0 %v833
    %1153 = vmatprep.subr.bf16.mxu0 %v838
    %1154 = vmatpush1.bf16.msra.mxu0 %v837
    %1155 = vmatprep.subr.bf16.mxu0 %v842
    %1156 = vmatpush1.bf16.msra.mxu0 %v841
    %1157 = vmatprep.subr.bf16.mxu0 %v846
    %1158 = vmatpush1.bf16.msra.mxu0 %v845
    %1159 = vmatprep.subr.bf16.mxu0 %v850
    %1160 = vmatpush1.bf16.msra.mxu0 %v849
    %1161 = vmatprep.subr.bf16.mxu0 %v854
    %1162 = vmatpush1.bf16.msra.mxu0 %v853
    %1163 = vmatprep.subr.bf16.mxu0 %v858
    %1164 = vmatpush1.bf16.msra.mxu0 %v857
    %1165 = vmatprep.mubr.bf16.mxu0 %v258
    %1166 = vmatmul.mubr.bf16.gmra.mrb[0].mxu0 %v257
    %v1167 = vpop.f32.mrb[0].mxu0
    %v1168 = vadd.f32 %v402, %v1167
    %v1169 = vpop.f32.mrb[0].mxu0
    %v1170 = vadd.f32 %v406, %v1169
    %v1171 = vpop.f32.mrb[0].mxu0
    %v1172 = vpop.f32.mrb[0].mxu0
    %1173 = vdwg.mxu0
    %1174 = vmatprep.subr.bf16.mxu0 %v862
    %1175 = vmatpush1.bf16.msra.mxu0 %v861
    %1176 = vmatprep.subr.bf16.mxu0 %v866
    %1177 = vmatpush1.bf16.msra.mxu0 %v865
    %1178 = vmatprep.subr.bf16.mxu0 %v870
    %1179 = vmatpush1.bf16.msra.mxu0 %v869
    %1180 = vmatprep.subr.bf16.mxu0 %v874
    %1181 = vmatpush1.bf16.msra.mxu0 %v873
    %1182 = vmatprep.subr.bf16.mxu0 %v878
    %1183 = vmatpush1.bf16.msra.mxu0 %v877
    %1184 = vmatprep.subr.bf16.mxu0 %v882
    %1185 = vmatpush1.bf16.msra.mxu0 %v881
    %1186 = vmatprep.subr.bf16.mxu0 %v886
    %1187 = vmatpush1.bf16.msra.mxu0 %v885
    %1188 = vmatprep.subr.bf16.mxu0 %v890
    %1189 = vmatpush1.bf16.msra.mxu0 %v889
    %1190 = vmatprep.subr.bf16.mxu0 %v894
    %1191 = vmatpush1.bf16.msra.mxu0 %v893
    %1192 = vmatprep.subr.bf16.mxu0 %v898
    %1193 = vmatpush1.bf16.msra.mxu0 %v897
    %1194 = vmatprep.subr.bf16.mxu0 %v902
    %1195 = vmatpush1.bf16.msra.mxu0 %v901
    %1196 = vmatprep.subr.bf16.mxu0 %v906
    %1197 = vmatpush1.bf16.msra.mxu0 %v905
    %1198 = vmatprep.subr.bf16.mxu0 %v910
    %1199 = vmatpush1.bf16.msra.mxu0 %v909
    %1200 = vmatprep.subr.bf16.mxu0 %v914
    %1201 = vmatpush1.bf16.msra.mxu0 %v913
    %1202 = vmatprep.subr.bf16.mxu0 %v918
    %1203 = vmatpush1.bf16.msra.mxu0 %v917
    %1204 = vmatprep.subr.bf16.mxu0 %v922
    %1205 = vmatpush1.bf16.msra.mxu0 %v921
    %1206 = vmatprep.mubr.bf16.mxu0 %v260
    %1207 = vmatmul.mubr.bf16.gmra.mrb[0].mxu0 %v259
    %v1208 = vpop.f32.mrb[0].mxu0
    %v1209 = vadd.f32 %v1168, %v1208
    %v1210 = vpop.f32.mrb[0].mxu0
    %v1211 = vadd.f32 %v1170, %v1210
    %v1212 = vpop.f32.mrb[0].mxu0
    %v1213 = vpop.f32.mrb[0].mxu0
    %1214 = vdwg.mxu0
    %v1215 = vrot.slane %v1127, 4
    %v1216 = vadd.f32 %v1127, %v1215
    %v1217 = vrot.slane %v1216, 2
    %v1218 = vadd.f32 %v1216, %v1217
    %v1219 = vrot.slane %v1218, 1
    %v1220 = vadd.f32 %v1218, %v1219
    %v1221 = vrot.slane %v1129, 4
    %v1222 = vadd.f32 %v1129, %v1221
    %v1223 = vrot.slane %v1222, 2
    %v1224 = vadd.f32 %v1222, %v1223
    %v1225 = vrot.slane %v1224, 1
    %v1226 = vadd.f32 %v1224, %v1225
    %v1227 = vrot.slane %v1209, 4
    %v1228 = vadd.f32 %v1209, %v1227
    %v1229 = vrot.slane %v1228, 2
    %v1230 = vadd.f32 %v1228, %v1229
    %v1231 = vrot.slane %v1230, 1
    %v1232 = vadd.f32 %v1230, %v1231
    %v1233 = vrot.slane %v1211, 4
    %v1234 = vadd.f32 %v1211, %v1233
    %v1235 = vrot.slane %v1234, 2
    %v1236 = vadd.f32 %v1234, %v1235
    %v1237 = vrot.slane %v1236, 1
    %v1238 = vadd.f32 %v1236, %v1237
    %v1239 = vrcp.pop 8.0
    %v1240 = vmul.f32 %v1220, %v1239
    %v1241 = vmul.f32 %v1226, %v1239
    %v1242 = vmul.f32 %v1232, %v1239
    %v1243 = vmul.f32 %v1238, %v1239
    %v1244 = vsub.f32 %v1127, %v1240
    %v1245 = vsub.f32 %v1129, %v1241
    %v1246 = vsub.f32 %v1209, %v1242
    %v1247 = vsub.f32 %v1211, %v1243
    %v1248 = vmul.f32 %v1244, %v1244
    %v1249 = vmul.f32 %v1245, %v1245
    %v1250 = vmul.f32 %v1246, %v1246
    %v1251 = vmul.f32 %v1247, %v1247
    %v1252 = vrot.slane %v1248, 4
    %v1253 = vadd.f32 %v1248, %v1252
    %v1254 = vrot.slane %v1253, 2
    %v1255 = vadd.f32 %v1253, %v1254
    %v1256 = vrot.slane %v1255, 1
    %v1257 = vadd.f32 %v1255, %v1256
    %v1258 = vrot.slane %v1249, 4
    %v1259 = vadd.f32 %v1249, %v1258
    %v1260 = vrot.slane %v1259, 2
    %v1261 = vadd.f32 %v1259, %v1260
    %v1262 = vrot.slane %v1261, 1
    %v1263 = vadd.f32 %v1261, %v1262
    %v1264 = vrot.slane %v1250, 4
    %v1265 = vadd.f32 %v1250, %v1264
    %v1266 = vrot.slane %v1265, 2
    %v1267 = vadd.f32 %v1265, %v1266
    %v1268 = vrot.slane %v1267, 1
    %v1269 = vadd.f32 %v1267, %v1268
    %v1270 = vrot.slane %v1251, 4
    %v1271 = vadd.f32 %v1251, %v1270
    %v1272 = vrot.slane %v1271, 2
    %v1273 = vadd.f32 %v1271, %v1272
    %v1274 = vrot.slane %v1273, 1
    %v1275 = vadd.f32 %v1273, %v1274
    %v1276 = vmul.f32 %v1257, %v1239
    %v1277 = vmul.f32 %v1263, %v1239
    %v1278 = vmul.f32 %v1269, %v1239
    %v1279 = vmul.f32 %v1275, %v1239
    %v1280 = vadd.f32 %v1276, 1e-05
    %v1281 = vadd.f32 %v1277, 1e-05
    %v1282 = vadd.f32 %v1278, 1e-05
    %v1283 = vadd.f32 %v1279, 1e-05
    %v1284 = vrsqrt.pop %v1280
    %v1285 = vrsqrt.pop %v1281
    %v1286 = vrsqrt.pop %v1282
    %v1287 = vrsqrt.pop %v1283
    %v1288 = vmul.f32 %v1244, %v1284
    %v1289 = vmul.f32 %v1245, %v1285
    %v1290 = vmul.f32 %v1246, %v1286
    %v1291 = vmul.f32 %v1247, %v1287
    %v1292 = vld [vmem:[%s5] sm:$0xf]
    %v1294 = vlaneseq
    %v1295 = vshrl.u32 %v1294, 7
    %v1296 = vsub.s32 0, %v1295
    %v1297 = vrot.slane %v1292, %v1296
    %v1298 = vlaneseq
    %v1299 = vshrl.u32 %v1298, 7
    %v1300 = vsub.s32 1, %v1299
    %v1301 = vrot.slane %v1292, %v1300
    %v1302 = vlaneseq
    %v1303 = vshrl.u32 %v1302, 7
    %v1304 = vsub.s32 2, %v1303
    %v1305 = vrot.slane %v1292, %v1304
    %v1306 = vlaneseq
    %v1307 = vshrl.u32 %v1306, 7
    %v1308 = vsub.s32 3, %v1307
    %v1309 = vrot.slane %v1292, %v1308
    %v1314 = vmul.f32 %v1288, %v1297
    %v1315 = vmul.f32 %v1289, %v1301
    %v1316 = vmul.f32 %v1290, %v1305
    %v1317 = vmul.f32 %v1291, %v1309
    %v1318 = vld [vmem:[%s6] sm:$0xf]
    %v1320 = vlaneseq
    %v1321 = vshrl.u32 %v1320, 7
    %v1322 = vsub.s32 0, %v1321
    %v1323 = vrot.slane %v1318, %v1322
    %v1324 = vlaneseq
    %v1325 = vshrl.u32 %v1324, 7
    %v1326 = vsub.s32 1, %v1325
    %v1327 = vrot.slane %v1318, %v1326
    %v1328 = vlaneseq
    %v1329 = vshrl.u32 %v1328, 7
    %v1330 = vsub.s32 2, %v1329
    %v1331 = vrot.slane %v1318, %v1330
    %v1332 = vlaneseq
    %v1333 = vshrl.u32 %v1332, 7
    %v1334 = vsub.s32 3, %v1333
    %v1335 = vrot.slane %v1318, %v1334
    %v1340 = vadd.f32 %v1314, %v1323
    %v1341 = vadd.f32 %v1315, %v1327
    %v1342 = vadd.f32 %v1316, %v1331
    %v1343 = vadd.f32 %v1317, %v1335
    %vm1344 = vcmp.gt.f32.partialorder %v1340, 0.0
    %vm1345 = vcmp.gt.f32.partialorder %v1341, 0.0
    %vm1346 = vcmp.gt.f32.partialorder %v1342, 0.0
    %vm1347 = vcmp.gt.f32.partialorder %v1343, 0.0
    %v1348 = vmul.f32 %v1340, 0.2
    %v1349 = vmul.f32 %v1341, 0.2
    %v1350 = vmul.f32 %v1342, 0.2
    %v1351 = vmul.f32 %v1343, 0.2
    %v1352 = vsel %vm1344, %v1340, %v1348
    %v1353 = vsel %vm1345, %v1341, %v1349
    %v1354 = vsel %vm1346, %v1342, %v1350
    %v1355 = vsel %vm1347, %v1343, %v1351
    %v1356 = vpack.c.bf16 %v1352, %v1352
    %v1357 = vpack.c.bf16 %v1353, %v1353
    %v1358 = vpack.c.bf16 %v1354, %v1354
    %v1359 = vpack.c.bf16 %v1355, %v1355
    %v1360 = vld [vmem:[#allocation8] sm:$0xff]
    %v1361 = vld [vmem:[#allocation8 + $0x8] sm:$0xff]
    %v1362 = vld [vmem:[#allocation8 + $0x10] sm:$0xff]
    %v1363 = vld [vmem:[#allocation8 + $0x18] sm:$0xff]
    %v1364 = vld [vmem:[#allocation8 + $0x20] sm:$0xff]
    %v1365 = vld [vmem:[#allocation8 + $0x28] sm:$0xff]
    %v1366 = vld [vmem:[#allocation8 + $0x30] sm:$0xff]
    %v1367 = vld [vmem:[#allocation8 + $0x38] sm:$0xff]
    %v1368 = vld [vmem:[#allocation8 + $0x40] sm:$0xff]
    %v1369 = vld [vmem:[#allocation8 + $0x48] sm:$0xff]
    %v1370 = vld [vmem:[#allocation8 + $0x50] sm:$0xff]
    %v1371 = vld [vmem:[#allocation8 + $0x58] sm:$0xff]
    %v1372 = vld [vmem:[#allocation8 + $0x60] sm:$0xff]
    %v1373 = vld [vmem:[#allocation8 + $0x68] sm:$0xff]
    %v1374 = vld [vmem:[#allocation8 + $0x70] sm:$0xff]
    %v1375 = vld [vmem:[#allocation8 + $0x78] sm:$0xff]
    %v1376 = vld [vmem:[#allocation8 + $0x80] sm:$0xff]
    %v1377 = vld [vmem:[#allocation8 + $0x88] sm:$0xff]
    %v1378 = vld [vmem:[#allocation8 + $0x90] sm:$0xff]
    %v1379 = vld [vmem:[#allocation8 + $0x98] sm:$0xff]
    %v1380 = vld [vmem:[#allocation8 + $0xa0] sm:$0xff]
    %v1381 = vld [vmem:[#allocation8 + $0xa8] sm:$0xff]
    %v1382 = vld [vmem:[#allocation8 + $0xb0] sm:$0xff]
    %v1383 = vld [vmem:[#allocation8 + $0xb8] sm:$0xff]
    %v1384 = vld [vmem:[#allocation8 + $0xc0] sm:$0xff]
    %v1385 = vld [vmem:[#allocation8 + $0xc8] sm:$0xff]
    %v1386 = vld [vmem:[#allocation8 + $0xd0] sm:$0xff]
    %v1387 = vld [vmem:[#allocation8 + $0xd8] sm:$0xff]
    %v1388 = vld [vmem:[#allocation8 + $0xe0] sm:$0xff]
    %v1389 = vld [vmem:[#allocation8 + $0xe8] sm:$0xff]
    %v1390 = vld [vmem:[#allocation8 + $0xf0] sm:$0xff]
    %v1391 = vld [vmem:[#allocation8 + $0xf8] sm:$0xff]
    %v1392 = vld [vmem:[#allocation8 + $0x100] sm:$0xff]
    %v1393 = vld [vmem:[#allocation8 + $0x108] sm:$0xff]
    %v1394 = vld [vmem:[#allocation8 + $0x110] sm:$0xff]
    %v1395 = vld [vmem:[#allocation8 + $0x118] sm:$0xff]
    %v1396 = vld [vmem:[#allocation8 + $0x120] sm:$0xff]
    %v1397 = vld [vmem:[#allocation8 + $0x128] sm:$0xff]
    %v1398 = vld [vmem:[#allocation8 + $0x130] sm:$0xff]
    %v1399 = vld [vmem:[#allocation8 + $0x138] sm:$0xff]
    %v1400 = vld [vmem:[#allocation8 + $0x140] sm:$0xff]
    %v1401 = vld [vmem:[#allocation8 + $0x148] sm:$0xff]
    %v1402 = vld [vmem:[#allocation8 + $0x150] sm:$0xff]
    %v1403 = vld [vmem:[#allocation8 + $0x158] sm:$0xff]
    %v1404 = vld [vmem:[#allocation8 + $0x160] sm:$0xff]
    %v1405 = vld [vmem:[#allocation8 + $0x168] sm:$0xff]
    %v1406 = vld [vmem:[#allocation8 + $0x170] sm:$0xff]
    %v1407 = vld [vmem:[#allocation8 + $0x178] sm:$0xff]
    %v1408 = vld [vmem:[#allocation8 + $0x180] sm:$0xff]
    %v1409 = vld [vmem:[#allocation8 + $0x188] sm:$0xff]
    %v1410 = vld [vmem:[#allocation8 + $0x190] sm:$0xff]
    %v1411 = vld [vmem:[#allocation8 + $0x198] sm:$0xff]
    %v1412 = vld [vmem:[#allocation8 + $0x1a0] sm:$0xff]
    %v1413 = vld [vmem:[#allocation8 + $0x1a8] sm:$0xff]
    %v1414 = vld [vmem:[#allocation8 + $0x1b0] sm:$0xff]
    %v1415 = vld [vmem:[#allocation8 + $0x1b8] sm:$0xff]
    %v1416 = vld [vmem:[#allocation8 + $0x1c0] sm:$0xff]
    %v1417 = vld [vmem:[#allocation8 + $0x1c8] sm:$0xff]
    %v1418 = vld [vmem:[#allocation8 + $0x1d0] sm:$0xff]
    %v1419 = vld [vmem:[#allocation8 + $0x1d8] sm:$0xff]
    %v1420 = vld [vmem:[#allocation8 + $0x1e0] sm:$0xff]
    %v1421 = vld [vmem:[#allocation8 + $0x1e8] sm:$0xff]
    %v1422 = vld [vmem:[#allocation8 + $0x1f0] sm:$0xff]
    %v1423 = vld [vmem:[#allocation8 + $0x1f8] sm:$0xff]
    %v1424 = vld [vmem:[%s8] sm:$0x3]
    %v1426 = vlaneseq
    %v1427 = vshrl.u32 %v1426, 7
    %v1428 = vsub.s32 0, %v1427
    %v1429 = vrot.slane %v1424, %v1428
    %v1430 = vlaneseq
    %v1431 = vshrl.u32 %v1430, 7
    %v1432 = vsub.s32 1, %v1431
    %v1433 = vrot.slane %v1424, %v1432
    %v1500 = vunpack.c.l.b16 %v1360
    %v1501 = vunpack.c.h.b16 %v1360
    %v1502 = vunpack.c.l.b16 %v1361
    %v1503 = vunpack.c.h.b16 %v1361
    %v1504 = vunpack.c.l.b16 %v1362
    %v1505 = vunpack.c.h.b16 %v1362
    %v1506 = vunpack.c.l.b16 %v1363
    %v1507 = vunpack.c.h.b16 %v1363
    %v1508 = vunpack.c.l.b16 %v1364
    %v1509 = vunpack.c.h.b16 %v1364
    %v1510 = vunpack.c.l.b16 %v1365
    %v1511 = vunpack.c.h.b16 %v1365
    %v1512 = vunpack.c.l.b16 %v1366
    %v1513 = vunpack.c.h.b16 %v1366
    %v1514 = vunpack.c.l.b16 %v1367
    %v1515 = vunpack.c.h.b16 %v1367
    %v1516 = vunpack.c.l.b16 %v1368
    %v1517 = vunpack.c.h.b16 %v1368
    %v1518 = vunpack.c.l.b16 %v1369
    %v1519 = vunpack.c.h.b16 %v1369
    %v1520 = vunpack.c.l.b16 %v1370
    %v1521 = vunpack.c.h.b16 %v1370
    %v1522 = vunpack.c.l.b16 %v1371
    %v1523 = vunpack.c.h.b16 %v1371
    %v1524 = vunpack.c.l.b16 %v1372
    %v1525 = vunpack.c.h.b16 %v1372
    %v1526 = vunpack.c.l.b16 %v1373
    %v1527 = vunpack.c.h.b16 %v1373
    %v1528 = vunpack.c.l.b16 %v1374
    %v1529 = vunpack.c.h.b16 %v1374
    %v1530 = vunpack.c.l.b16 %v1375
    %v1531 = vunpack.c.h.b16 %v1375
    %v1532 = vunpack.c.l.b16 %v1376
    %v1533 = vunpack.c.h.b16 %v1376
    %v1534 = vunpack.c.l.b16 %v1377
    %v1535 = vunpack.c.h.b16 %v1377
    %v1536 = vunpack.c.l.b16 %v1378
    %v1537 = vunpack.c.h.b16 %v1378
    %v1538 = vunpack.c.l.b16 %v1379
    %v1539 = vunpack.c.h.b16 %v1379
    %v1540 = vunpack.c.l.b16 %v1380
    %v1541 = vunpack.c.h.b16 %v1380
    %v1542 = vunpack.c.l.b16 %v1381
    %v1543 = vunpack.c.h.b16 %v1381
    %v1544 = vunpack.c.l.b16 %v1382
    %v1545 = vunpack.c.h.b16 %v1382
    %v1546 = vunpack.c.l.b16 %v1383
    %v1547 = vunpack.c.h.b16 %v1383
    %v1548 = vunpack.c.l.b16 %v1384
    %v1549 = vunpack.c.h.b16 %v1384
    %v1550 = vunpack.c.l.b16 %v1385
    %v1551 = vunpack.c.h.b16 %v1385
    %v1552 = vunpack.c.l.b16 %v1386
    %v1553 = vunpack.c.h.b16 %v1386
    %v1554 = vunpack.c.l.b16 %v1387
    %v1555 = vunpack.c.h.b16 %v1387
    %v1556 = vunpack.c.l.b16 %v1388
    %v1557 = vunpack.c.h.b16 %v1388
    %v1558 = vunpack.c.l.b16 %v1389
    %v1559 = vunpack.c.h.b16 %v1389
    %v1560 = vunpack.c.l.b16 %v1390
    %v1561 = vunpack.c.h.b16 %v1390
    %v1562 = vunpack.c.l.b16 %v1391
    %v1563 = vunpack.c.h.b16 %v1391
    %v1564 = vunpack.c.l.b16 %v1392
    %v1565 = vunpack.c.h.b16 %v1392
    %v1566 = vunpack.c.l.b16 %v1393
    %v1567 = vunpack.c.h.b16 %v1393
    %v1568 = vunpack.c.l.b16 %v1394
    %v1569 = vunpack.c.h.b16 %v1394
    %v1570 = vunpack.c.l.b16 %v1395
    %v1571 = vunpack.c.h.b16 %v1395
    %v1572 = vunpack.c.l.b16 %v1396
    %v1573 = vunpack.c.h.b16 %v1396
    %v1574 = vunpack.c.l.b16 %v1397
    %v1575 = vunpack.c.h.b16 %v1397
    %v1576 = vunpack.c.l.b16 %v1398
    %v1577 = vunpack.c.h.b16 %v1398
    %v1578 = vunpack.c.l.b16 %v1399
    %v1579 = vunpack.c.h.b16 %v1399
    %v1580 = vunpack.c.l.b16 %v1400
    %v1581 = vunpack.c.h.b16 %v1400
    %v1582 = vunpack.c.l.b16 %v1401
    %v1583 = vunpack.c.h.b16 %v1401
    %v1584 = vunpack.c.l.b16 %v1402
    %v1585 = vunpack.c.h.b16 %v1402
    %v1586 = vunpack.c.l.b16 %v1403
    %v1587 = vunpack.c.h.b16 %v1403
    %v1588 = vunpack.c.l.b16 %v1404
    %v1589 = vunpack.c.h.b16 %v1404
    %v1590 = vunpack.c.l.b16 %v1405
    %v1591 = vunpack.c.h.b16 %v1405
    %v1592 = vunpack.c.l.b16 %v1406
    %v1593 = vunpack.c.h.b16 %v1406
    %v1594 = vunpack.c.l.b16 %v1407
    %v1595 = vunpack.c.h.b16 %v1407
    %v1596 = vunpack.c.l.b16 %v1408
    %v1597 = vunpack.c.h.b16 %v1408
    %v1598 = vunpack.c.l.b16 %v1409
    %v1599 = vunpack.c.h.b16 %v1409
    %v1600 = vunpack.c.l.b16 %v1410
    %v1601 = vunpack.c.h.b16 %v1410
    %v1602 = vunpack.c.l.b16 %v1411
    %v1603 = vunpack.c.h.b16 %v1411
    %v1604 = vunpack.c.l.b16 %v1412
    %v1605 = vunpack.c.h.b16 %v1412
    %v1606 = vunpack.c.l.b16 %v1413
    %v1607 = vunpack.c.h.b16 %v1413
    %v1608 = vunpack.c.l.b16 %v1414
    %v1609 = vunpack.c.h.b16 %v1414
    %v1610 = vunpack.c.l.b16 %v1415
    %v1611 = vunpack.c.h.b16 %v1415
    %v1612 = vunpack.c.l.b16 %v1416
    %v1613 = vunpack.c.h.b16 %v1416
    %v1614 = vunpack.c.l.b16 %v1417
    %v1615 = vunpack.c.h.b16 %v1417
    %v1616 = vunpack.c.l.b16 %v1418
    %v1617 = vunpack.c.h.b16 %v1418
    %v1618 = vunpack.c.l.b16 %v1419
    %v1619 = vunpack.c.h.b16 %v1419
    %v1620 = vunpack.c.l.b16 %v1420
    %v1621 = vunpack.c.h.b16 %v1420
    %v1622 = vunpack.c.l.b16 %v1421
    %v1623 = vunpack.c.h.b16 %v1421
    %v1624 = vunpack.c.l.b16 %v1422
    %v1625 = vunpack.c.h.b16 %v1422
    %v1626 = vunpack.c.l.b16 %v1423
    %v1627 = vunpack.c.h.b16 %v1423
    %v1628 = vpack.c.b16 %v1502, %v1500
    %v1629 = vpack.c.b16 %v1503, %v1501
    %v1630 = vpack.c.b16 %v1506, %v1504
    %v1631 = vpack.c.b16 %v1507, %v1505
    %v1632 = vpack.c.b16 %v1510, %v1508
    %v1633 = vpack.c.b16 %v1511, %v1509
    %v1634 = vpack.c.b16 %v1514, %v1512
    %v1635 = vpack.c.b16 %v1515, %v1513
    %v1636 = vpack.c.b16 %v1518, %v1516
    %v1637 = vpack.c.b16 %v1519, %v1517
    %v1638 = vpack.c.b16 %v1522, %v1520
    %v1639 = vpack.c.b16 %v1523, %v1521
    %v1640 = vpack.c.b16 %v1526, %v1524
    %v1641 = vpack.c.b16 %v1527, %v1525
    %v1642 = vpack.c.b16 %v1530, %v1528
    %v1643 = vpack.c.b16 %v1531, %v1529
    %v1644 = vpack.c.b16 %v1534, %v1532
    %v1645 = vpack.c.b16 %v1535, %v1533
    %v1646 = vpack.c.b16 %v1538, %v1536
    %v1647 = vpack.c.b16 %v1539, %v1537
    %v1648 = vpack.c.b16 %v1542, %v1540
    %v1649 = vpack.c.b16 %v1543, %v1541
    %v1650 = vpack.c.b16 %v1546, %v1544
    %v1651 = vpack.c.b16 %v1547, %v1545
    %v1652 = vpack.c.b16 %v1550, %v1548
    %v1653 = vpack.c.b16 %v1551, %v1549
    %v1654 = vpack.c.b16 %v1554, %v1552
    %v1655 = vpack.c.b16 %v1555, %v1553
    %v1656 = vpack.c.b16 %v1558, %v1556
    %v1657 = vpack.c.b16 %v1559, %v1557
    %v1658 = vpack.c.b16 %v1562, %v1560
    %v1659 = vpack.c.b16 %v1563, %v1561
    %v1660 = vpack.c.b16 %v1566, %v1564
    %v1661 = vpack.c.b16 %v1567, %v1565
    %v1662 = vpack.c.b16 %v1570, %v1568
    %v1663 = vpack.c.b16 %v1571, %v1569
    %v1664 = vpack.c.b16 %v1574, %v1572
    %v1665 = vpack.c.b16 %v1575, %v1573
    %v1666 = vpack.c.b16 %v1578, %v1576
    %v1667 = vpack.c.b16 %v1579, %v1577
    %v1668 = vpack.c.b16 %v1582, %v1580
    %v1669 = vpack.c.b16 %v1583, %v1581
    %v1670 = vpack.c.b16 %v1586, %v1584
    %v1671 = vpack.c.b16 %v1587, %v1585
    %v1672 = vpack.c.b16 %v1590, %v1588
    %v1673 = vpack.c.b16 %v1591, %v1589
    %v1674 = vpack.c.b16 %v1594, %v1592
    %v1675 = vpack.c.b16 %v1595, %v1593
    %v1676 = vpack.c.b16 %v1598, %v1596
    %v1677 = vpack.c.b16 %v1599, %v1597
    %v1678 = vpack.c.b16 %v1602, %v1600
    %v1679 = vpack.c.b16 %v1603, %v1601
    %v1680 = vpack.c.b16 %v1606, %v1604
    %v1681 = vpack.c.b16 %v1607, %v1605
    %v1682 = vpack.c.b16 %v1610, %v1608
    %v1683 = vpack.c.b16 %v1611, %v1609
    %v1684 = vpack.c.b16 %v1614, %v1612
    %v1685 = vpack.c.b16 %v1615, %v1613
    %v1686 = vpack.c.b16 %v1618, %v1616
    %v1687 = vpack.c.b16 %v1619, %v1617
    %v1688 = vpack.c.b16 %v1622, %v1620
    %v1689 = vpack.c.b16 %v1623, %v1621
    %v1690 = vpack.c.b16 %v1626, %v1624
    %v1691 = vpack.c.b16 %v1627, %v1625
    %1756 = vmatprep.subr.bf16.mxu0 %v1629
    %1757 = vmatpush1.bf16.msra.mxu0 %v1628
    %1758 = vmatprep.subr.bf16.mxu0 %v1631
    %1759 = vmatpush1.bf16.msra.mxu0 %v1630
    %1760 = vmatprep.subr.bf16.mxu0 %v1633
    %1761 = vmatpush1.bf16.msra.mxu0 %v1632
    %1762 = vmatprep.subr.bf16.mxu0 %v1635
    %1763 = vmatpush1.bf16.msra.mxu0 %v1634
    %1764 = vmatprep.subr.bf16.mxu0 %v1637
    %1765 = vmatpush1.bf16.msra.mxu0 %v1636
    %1766 = vmatprep.subr.bf16.mxu0 %v1639
    %1767 = vmatpush1.bf16.msra.mxu0 %v1638
    %1768 = vmatprep.subr.bf16.mxu0 %v1641
    %1769 = vmatpush1.bf16.msra.mxu0 %v1640
    %1770 = vmatprep.subr.bf16.mxu0 %v1643
    %1771 = vmatpush1.bf16.msra.mxu0 %v1642
    %1772 = vmatprep.subr.bf16.mxu0 %v1645
    %1773 = vmatpush1.bf16.msra.mxu0 %v1644
    %1774 = vmatprep.subr.bf16.mxu0 %v1647
    %1775 = vmatpush1.bf16.msra.mxu0 %v1646
    %1776 = vmatprep.subr.bf16.mxu0 %v1649
    %1777 = vmatpush1.bf16.msra.mxu0 %v1648
    %1778 = vmatprep.subr.bf16.mxu0 %v1651
    %1779 = vmatpush1.bf16.msra.mxu0 %v1650
    %1780 = vmatprep.subr.bf16.mxu0 %v1653
    %1781 = vmatpush1.bf16.msra.mxu0 %v1652
    %1782 = vmatprep.subr.bf16.mxu0 %v1655
    %1783 = vmatpush1.bf16.msra.mxu0 %v1654
    %1784 = vmatprep.subr.bf16.mxu0 %v1657
    %1785 = vmatpush1.bf16.msra.mxu0 %v1656
    %1786 = vmatprep.subr.bf16.mxu0 %v1659
    %1787 = vmatpush1.bf16.msra.mxu0 %v1658
    %1788 = vmatprep.mubr.bf16.mxu0 %v1357
    %1789 = vmatmul.mubr.bf16.gmra.mrb[0].mxu0 %v1356
    %v1790 = vpop.f32.mrb[0].mxu0
    %v1791 = vadd.f32 %v1429, %v1790
    %v1792 = vpop.f32.mrb[0].mxu0
    %v1793 = vadd.f32 %v1433, %v1792
    %v1794 = vpop.f32.mrb[0].mxu0
    %v1795 = vpop.f32.mrb[0].mxu0
    %1796 = vdwg.mxu0
    %1797 = vmatprep.subr.bf16.mxu0 %v1661
    %1798 = vmatpush1.bf16.msra.mxu0 %v1660
    %1799 = vmatprep.subr.bf16.mxu0 %v1663
    %1800 = vmatpush1.bf16.msra.mxu0 %v1662
    %1801 = vmatprep.subr.bf16.mxu0 %v1665
    %1802 = vmatpush1.bf16.msra.mxu0 %v1664
    %1803 = vmatprep.subr.bf16.mxu0 %v1667
    %1804 = vmatpush1.bf16.msra.mxu0 %v1666
    %1805 = vmatprep.subr.bf16.mxu0 %v1669
    %1806 = vmatpush1.bf16.msra.mxu0 %v1668
    %1807 = vmatprep.subr.bf16.mxu0 %v1671
    %1808 = vmatpush1.bf16.msra.mxu0 %v1670
    %1809 = vmatprep.subr.bf16.mxu0 %v1673
    %1810 = vmatpush1.bf16.msra.mxu0 %v1672
    %1811 = vmatprep.subr.bf16.mxu0 %v1675
    %1812 = vmatpush1.bf16.msra.mxu0 %v1674
    %1813 = vmatprep.subr.bf16.mxu0 %v1677
    %1814 = vmatpush1.bf16.msra.mxu0 %v1676
    %1815 = vmatprep.subr.bf16.mxu0 %v1679
    %1816 = vmatpush1.bf16.msra.mxu0 %v1678
    %1817 = vmatprep.subr.bf16.mxu0 %v1681
    %1818 = vmatpush1.bf16.msra.mxu0 %v1680
    %1819 = vmatprep.subr.bf16.mxu0 %v1683
    %1820 = vmatpush1.bf16.msra.mxu0 %v1682
    %1821 = vmatprep.subr.bf16.mxu0 %v1685
    %1822 = vmatpush1.bf16.msra.mxu0 %v1684
    %1823 = vmatprep.subr.bf16.mxu0 %v1687
    %1824 = vmatpush1.bf16.msra.mxu0 %v1686
    %1825 = vmatprep.subr.bf16.mxu0 %v1689
    %1826 = vmatpush1.bf16.msra.mxu0 %v1688
    %1827 = vmatprep.subr.bf16.mxu0 %v1691
    %1828 = vmatpush1.bf16.msra.mxu0 %v1690
    %1829 = vmatprep.mubr.bf16.mxu0 %v1359
    %1830 = vmatmul.mubr.bf16.gmra.mrb[0].mxu0 %v1358
    %v1831 = vpop.f32.mrb[0].mxu0
    %v1832 = vadd.f32 %v1791, %v1831
    %v1833 = vpop.f32.mrb[0].mxu0
    %v1834 = vadd.f32 %v1793, %v1833
    %v1835 = vpop.f32.mrb[0].mxu0
    %v1836 = vpop.f32.mrb[0].mxu0
    %1837 = vdwg.mxu0
    %v1838 = vtanh.pop %v1832
    %v1839 = vtanh.pop %v1834
    %1840 = vst [vmem:[#allocation10] sm:$0xff] %v1838
    %1841 = vst [vmem:[#allocation10 + $0x8] sm:$0xff] %v1839
    // Predicated region
    $region54: #{tpu_custom_call.1} parent=1 // pred_check
      _
    $region55: #{tpu_custom_call.1} parent=1 // pred_check_branch
      %1843 = sbr.rel (0) target = $region57
    $region56: #{tpu_custom_call.1} parent=1 // pred_region
      %s1845 = ssub.s32 256, 256
      %1846 = vsyncadd [#allocation4], %s1845
      %s1848 = sshll.u32 [#allocation10], 4
      %s1849 = int_to_ptr.vmem [resolvable:$true] %s1848
      %1851 = dma.vmem_to_hbm [thread:$0]  %s1849, 256, %s9, [#allocation4]
    $region57: #{tpu_custom_call.1} parent=1 // pred_fallthru
      _
    // Predicated region
    $region58: #{tpu_custom_call.1} parent=1 // pred_check
      _
    $region59: #{tpu_custom_call.1} parent=1 // pred_check_branch
      %1853 = sbr.rel (0) target = $region61
    $region60: #{tpu_custom_call.1} parent=1 // pred_region
      %1854 = dma.done [#allocation4], 256
    $region61: #{tpu_custom_call.1} parent=1 // pred_fallthru
      _
    %1855 = vsyncpa [#allocation3], 1
    %1856 = vsyncpa [#allocation6], 1
    %1857 = vsyncpa [#allocation9], 1
    %1858 = vsyncpa [#allocation4], 1

</llo_original>
